<compile_context>
chip_gen: v7x
topology: tpu7x:2x2x1
jax: 0.10.0
libtpu: 0.0.40
codegen_flags: <defaults>
</compile_context>

<pallas_src>
import functools

import jax
import jax.numpy as jnp
from jax.experimental import pallas as pl
from jax.experimental.pallas import tpu as pltpu


# --------------------------------------------------------------------------------------
# Kernel 1: fused 2x2 max-pool + 'same' conv (bf16 im2col, single bf16 MXU matmul),
#           also emits per-block sum / sum-of-squares for the batch-norm statistics.
# --------------------------------------------------------------------------------------
def _pool_conv_kernel(x_ref, w_ref, y_ref, stats_ref, pad_ref,
                      *, K, P, Hp, Wp, Bt, CinN, CoutN):
    # x_ref    : (Bt, 2*Hp, Wp, 2*CinN)   bf16  NHWC with W folded pairwise into the lane dim
    # w_ref    : (K*K*CinN, CoutN)        bf16  im2col weight matrix (HWIO flattened)
    # y_ref    : (Bt, Hp, Wp, CoutN)      bf16  pre-BN conv output
    # stats_ref: (1, 2, CoutN)            f32   row 0: sum, row 1: sum of squares (this block)
    # pad_ref  : (Bt, Hp+2P, Wp+2P, CinN) bf16  scratch (zero halo for the 'same' conv)

    # ---- 2x2 max pool, stride 2 (pointwise over channels; bf16 max is order-preserving) ----
    xb = x_ref[...]                                        # (Bt, 2*Hp, Wp, 2*CinN) bf16
    xr = xb.reshape(Bt, Hp, 2, Wp, 2 * CinN)               # split leading H dim: no relayout
    xh = jnp.max(xr, axis=2)                               # row-pair max  (Bt, Hp, Wp, 2*CinN)
    pooled = jnp.maximum(xh[..., :CinN], xh[..., CinN:])   # col-pair max  (Bt, Hp, Wp, CinN)

    # ---- zero only the halo of the pad scratch.  The interior is fully overwritten every
    #      step; per-step halo zeroing stays correct even if the (parallel) batch axis is
    #      split across TensorCores (each core owns its own scratch). ----
    if P > 0:
        zr = jnp.zeros((Bt, P, Wp + 2 * P, CinN), jnp.bfloat16)
        zc = jnp.zeros((Bt, Hp + 2 * P, P, CinN), jnp.bfloat16)
        pad_ref[:, 0:P, :, :] = zr
        pad_ref[:, Hp + P:Hp + 2 * P, :, :] = zr
        pad_ref[:, :, 0:P, :] = zc
        pad_ref[:, :, Wp + P:Wp + 2 * P, :] = zc
    pad_ref[:, P:P + Hp, P:P + Wp, :] = pooled

    # ---- bf16 im2col: concatenate the K*K shifted views along channels -> ONE MXU matmul ----
    # TODO(synk): when CinN % 128 == 0, a lane-dense pad layout (Bt, Hp+2P, (Wp+2P)*CinN) makes
    #             the dj shifts free lane slices; for small CinN it forces lane-split relayouts
    #             when rebuilding patches, so the 4-D layout is kept here.
    taps = []
    for di in range(K):
        for dj in range(K):
            taps.append(pad_ref[:, di:di + Hp, dj:dj + Wp, :])
    patches = jnp.concatenate(taps, axis=-1)               # (Bt, Hp, Wp, K*K*CinN) bf16
    pm = patches.reshape(Bt * Hp * Wp, K * K * CinN)
    acc = jnp.dot(pm, w_ref[...], preferred_element_type=jnp.float32)   # (M, CoutN) f32

    # ---- outputs ----
    y_ref[...] = acc.reshape(Bt, Hp, Wp, CoutN).astype(jnp.bfloat16)
    s = jnp.sum(acc, axis=0, keepdims=True)
    ss = jnp.sum(acc * acc, axis=0, keepdims=True)
    stats_ref[...] = jnp.concatenate([s, ss], axis=0).reshape(1, 2, CoutN)


# --------------------------------------------------------------------------------------
# Kernel 2: batch-norm affine (precomputed per-channel scale/shift) + ReLU.
#           Operates on the lane-dense folded view (last dim = Wp*CoutN), bf16 in, f32 out.
# --------------------------------------------------------------------------------------
def _bn_relu_kernel(y_ref, scale_ref, shift_ref, o_ref):
    y = y_ref[...].astype(jnp.float32)
    sc = scale_ref[...].reshape(1, 1, -1)
    sh = shift_ref[...].reshape(1, 1, -1)
    o_ref[...] = jnp.maximum(y * sc + sh, 0.0)


# --------------------------------------------------------------------------------------
# VMEM budgeting
# --------------------------------------------------------------------------------------
def _vmem_capacity_bytes():
    try:
        info = pltpu.get_tpu_info()
        cap = int(getattr(info, "vmem_capacity_bytes", 0))
        if cap > 0:
            return cap
    except Exception:
        pass
    return 64 << 20   # conservative default (v7x per-TensorCore VMEM)


def _step_vmem_bytes(bt, H, W, CinN, CoutN, K, Hp, Wp):
    """Full per-grid-step VMEM footprint of pass 1 (pass 2 is strictly smaller)."""
    P = (K - 1) // 2
    KKC = K * K * CinN
    m = bt * Hp * Wp
    in_b = 2 * bt * H * W * CinN * 2          # bf16 input block, double-buffered
    y_b = 2 * m * CoutN * 2                   # bf16 y block, double-buffered
    w_b = 2 * KKC * CoutN * 2                 # bf16 weight, double-buffered
    # TODO(synk): pl.Buffered(1) on the constant-index weight/scale/shift specs would drop one
    #             of those copies; kept default-buffered here for lowering safety.
    pad_b = bt * (Hp + 2 * P) * (Wp + 2 * P) * CinN * 2   # bf16 pad scratch
    pat_b = m * KKC * 2                       # bf16 im2col patches temporary
    acc_b = m * CoutN * 4                     # f32 matmul accumulator temporary
    st_b = 2 * 2 * CoutN * 4                  # stats block, double-buffered
    return int(1.25 * (in_b + y_b + w_b + pad_b + pat_b + acc_b + st_b))


def _pick_batch_block(B, H, W, CinN, CoutN, K, Hp, Wp, budget_bytes):
    """Largest divisor of B whose full per-step footprint fits the budget, targeting matmul
    M = Bt*Hp*Wp ~ 512 and (when B >= 2) at least two grid steps so both v7x TensorCores get
    work and input prefetch overlaps compute."""
    want = max(1, -(-512 // max(1, Hp * Wp)))   # ceil(512 / (Hp*Wp))
    cap = B if B == 1 else max(1, B // 2)       # keep >= 2 grid steps when possible
    best = 1
    for bt in range(1, B + 1):
        if B % bt:
            continue
        if bt > want or bt > cap:
            continue
        if _step_vmem_bytes(bt, H, W, CinN, CoutN, K, Hp, Wp) <= budget_bytes:
            best = max(best, bt)
    return best


# --------------------------------------------------------------------------------------
# Wrapper
# --------------------------------------------------------------------------------------
def down_conv_rot2d(x_nchw, w_oihw, bias, gamma, beta, *, N, eps=1e-5):
    # The per-field-constant conv bias cancels exactly under train-mode InnerBatchNorm
    # (mean subtraction removes any constant-per-field offset; variance unchanged).
    del bias

    B, CinN, H, W = x_nchw.shape
    CoutN, CinN2, K, _ = w_oihw.shape
    assert CinN2 == CinN
    Cout = CoutN // N
    # TODO(synk): PyTorch MaxPool2d(kernel=2) floors odd spatial sizes; only even H/W handled.
    assert H % 2 == 0 and W % 2 == 0, "even spatial sizes required"
    Hp, Wp = H // 2, W // 2
    P = (K - 1) // 2
    KKC = K * K * CinN
    WC = Wp * CoutN

    cap_bytes = _vmem_capacity_bytes()
    Bt = _pick_batch_block(B, H, W, CinN, CoutN, K, Hp, Wp, int(cap_bytes * 0.6))
    nb = B // Bt
    fp = _step_vmem_bytes(Bt, H, W, CinN, CoutN, K, Hp, Wp)
    vmem_limit = int(min(cap_bytes * 0.9, max(32 << 20, fp + (8 << 20))))
    cparams = pltpu.CompilerParams(dimension_semantics=("parallel",),
                                   vmem_limit_bytes=vmem_limit)

    # NHWC, with W folded pairwise into the lane dim; bf16 operands (halves the pass-1 HBM read).
    # TODO(synk): keep the surrounding model channels-last end-to-end to avoid this XLA-side
    #             transpose (a full extra HBM round trip of the activation).
    x_fold = (jnp.transpose(x_nchw, (0, 2, 3, 1))
              .astype(jnp.bfloat16).reshape(B, H, Wp, 2 * CinN))
    # OIHW -> HWIO -> (K*K*CinN, CoutN) im2col weight matrix; bf16 operands for the MXU.
    w_mat = jnp.transpose(w_oihw, (2, 3, 1, 0)).reshape(KKC, CoutN).astype(jnp.bfloat16)

    # TODO(synk): for B == 1 add a spatial row-block grid axis (P-row halo in the index_map)
    #             so both v7x TensorCores get work even with a single batch block.
    y, stats = pl.pallas_call(
        functools.partial(_pool_conv_kernel, K=K, P=P, Hp=Hp, Wp=Wp, Bt=Bt,
                          CinN=CinN, CoutN=CoutN),
        grid=(nb,),
        in_specs=[
            pl.BlockSpec((Bt, H, Wp, 2 * CinN), lambda b: (b, 0, 0, 0)),
            pl.BlockSpec((KKC, CoutN), lambda b: (0, 0)),
        ],
        out_specs=[
            pl.BlockSpec((Bt, Hp, Wp, CoutN), lambda b: (b, 0, 0, 0)),
            pl.BlockSpec((1, 2, CoutN), lambda b: (b, 0, 0)),
        ],
        out_shape=[
            jax.ShapeDtypeStruct((B, Hp, Wp, CoutN), jnp.bfloat16),
            jax.ShapeDtypeStruct((nb, 2, CoutN), jnp.float32),
        ],
        scratch_shapes=[pltpu.VMEM((Bt, Hp + 2 * P, Wp + 2 * P, CinN), jnp.bfloat16)],
        compiler_params=cparams,
    )(x_fold, w_mat)

    # InnerBatchNorm (train mode): one (mean, var) per field, shared over (B, N, Hp, Wp).
    # NOTE: var = E[y^2] - mean^2 in f32 (same formula as the pure-JAX reference); clamped at 0.
    #       Scale/shift are derived from f32 accumulator stats but applied to the bf16-rounded
    #       intermediate y (small systematic mismatch, covered by the bf16 tolerance).
    cnt = B * Hp * Wp * N
    s = jnp.sum(stats[:, 0, :], axis=0).reshape(Cout, N).sum(axis=1)
    ss = jnp.sum(stats[:, 1, :], axis=0).reshape(Cout, N).sum(axis=1)
    mean = s / cnt
    var = jnp.maximum(ss / cnt - mean * mean, 0.0)
    scale_f = gamma * jax.lax.rsqrt(var + eps)
    shift_f = beta - mean * scale_f
    scale_c = jnp.repeat(scale_f, N)                    # (CoutN,)
    shift_c = jnp.repeat(shift_f, N)
    scale_t = jnp.tile(scale_c, Wp).reshape(1, WC)      # tiled over W for the folded layout
    shift_t = jnp.tile(shift_c, Wp).reshape(1, WC)

    # Pass 2 (pure HBM bandwidth): bf16 reads, lane-dense blocks, f32 writes.
    # TODO(synk): emit bf16 here instead if the downstream layer accepts bf16 activations.
    y_fold = y.reshape(B, Hp, WC)                       # free row-major view of the same bytes
    out = pl.pallas_call(
        _bn_relu_kernel,
        grid=(nb,),
        in_specs=[
            pl.BlockSpec((Bt, Hp, WC), lambda b: (b, 0, 0)),
            pl.BlockSpec((1, WC), lambda b: (0, 0)),
            pl.BlockSpec((1, WC), lambda b: (0, 0)),
        ],
        out_specs=pl.BlockSpec((Bt, Hp, WC), lambda b: (b, 0, 0)),
        out_shape=jax.ShapeDtypeStruct((B, Hp, WC), jnp.float32),
        compiler_params=cparams,
    )(y_fold, scale_t, shift_t)

    return jnp.transpose(out.reshape(B, Hp, Wp, CoutN), (0, 3, 1, 2))   # back to NCHW


# --------------------------------------------------------------------------------------
# Deterministic parameter construction (synthetic, C_N regular->regular equivariant).
# TODO(synk): e2cnn's R2Conv samples filters from a steerable radial basis; here we build
#             synthetic weights with the same expanded (Cout*N, Cin*N, K, K) equivariant
#             structure (cyclic field permutation + spatial rotation, exact for N=4).
# --------------------------------------------------------------------------------------
def make_equivariant_weights(key, cin, cout, N, K):
    kb, kbias = jax.random.split(key)
    wb = jax.random.normal(kb, (cout, cin, N, K, K), jnp.float32)
    wb = wb * (1.0 / (K * K * cin * N) ** 0.5)
    b_field = jax.random.normal(kbias, (cout,), jnp.float32) * 0.1

    rows = []
    for o in range(cout):
        for s in range(N):
            cols = []
            for i in range(cin):
                for t in range(N):
                    base = wb[o, i, (t - s) % N]
                    cols.append(jnp.rot90(base, k=s))
            rows.append(jnp.stack(cols, axis=0))
    w_oihw = jnp.stack(rows, axis=0)                          # (cout*N, cin*N, K, K)
    bias = jnp.repeat(b_field, N) / jnp.sqrt(N)               # constant within each field
    return w_oihw, bias


# --------------------------------------------------------------------------------------
# Pure-JAX reference (for verification)
# --------------------------------------------------------------------------------------
def _reference(x_nchw, w_oihw, bias, gamma, beta, *, N, eps=1e-5):
    B, CinN, H, W = x_nchw.shape
    CoutN, _, K, _ = w_oihw.shape
    Cout = CoutN // N
    P = (K - 1) // 2
    xp = x_nchw.reshape(B, CinN, H // 2, 2, W // 2, 2).max(axis=(3, 5))
    y = jax.lax.conv_general_dilated(
        xp, w_oihw, (1, 1), [(P, P), (P, P)],
        dimension_numbers=("NCHW", "OIHW", "NCHW"),
        precision=jax.lax.Precision.HIGHEST,
    ) + bias[None, :, None, None]
    Hp, Wp = y.shape[2], y.shape[3]
    yf = y.reshape(B, Cout, N, Hp, Wp)
    mean = yf.mean(axis=(0, 2, 3, 4), keepdims=True)
    var = (yf * yf).mean(axis=(0, 2, 3, 4), keepdims=True) - mean * mean
    yn = (yf - mean) / jnp.sqrt(var + eps)
    yn = yn * gamma[None, :, None, None, None] + beta[None, :, None, None, None]
    return jnp.maximum(yn.reshape(B, CoutN, Hp, Wp), 0.0)


if __name__ == "__main__":
    key = jax.random.PRNGKey(0)
    B, Cin, Cout, N, H, W, K = 2, 4, 8, 4, 16, 16, 3
    CinN, CoutN = Cin * N, Cout * N

    kx, kw = jax.random.split(key)
    x = jax.random.normal(kx, (B, CinN, H, W), jnp.float32)           # NCHW like PyTorch
    w_oihw, bias = make_equivariant_weights(kw, Cin, Cout, N, K)
    gamma = jnp.ones((Cout,), jnp.float32)                            # InnerBatchNorm default init
    beta = jnp.zeros((Cout,), jnp.float32)

    out = down_conv_rot2d(x, w_oihw, bias, gamma, beta, N=N)
    out = jax.block_until_ready(out)

    ref = _reference(x, w_oihw, bias, gamma, beta, N=N)
    assert out.shape == (B, CoutN, H // 2, W // 2), out.shape
    max_err = float(jnp.max(jnp.abs(out - ref)))
    # bf16 MXU operands + bf16 intermediate `y` -> compare with bf16-appropriate tolerance.
    assert jnp.allclose(out, ref, atol=5e-2, rtol=2e-2), f"max abs err {max_err}"
    print("KERNEL_OK")
</pallas_src>

<mosaic_0001>
module attributes {stable_mosaic.version = 11 : i64} {
  func.func @_pool_conv_kernel(%arg0: i32, %arg1: memref<1x16x8x32xbf16, #tpu.memory_space<vmem>>, %arg2: memref<144x32xbf16, #tpu.memory_space<vmem>>, %arg3: memref<1x8x8x32xbf16, #tpu.memory_space<vmem>>, %arg4: memref<1x2x32xf32, #tpu.memory_space<vmem>>, %arg5: memref<1x10x10x16xbf16, #tpu.memory_space<vmem>>) attributes {dimension_semantics = [#tpu.dimension_semantics<parallel>], iteration_bounds = array<i64: 2>, scalar_prefetch = 0 : i64, scratch_operands = 1 : i64, tpu.core_type = #tpu.core_type<tc>, window_params = [{transform_indices = @transform_0, window_bounds = array<i64: 1, 16, 8, 32>}, {pipeline_mode = #tpu.pipeline_mode<synchronous>, transform_indices = @transform_1, window_bounds = array<i64: 144, 32>}, {transform_indices = @transform_2, window_bounds = array<i64: 1, 8, 8, 32>}, {transform_indices = @transform_3, window_bounds = array<i64: 1, 2, 32>}]} {
    %c0 = arith.constant 0 : index
    %c0_0 = arith.constant 0 : index
    %c0_1 = arith.constant 0 : index
    %c0_2 = arith.constant 0 : index
    %0 = vector.load %arg1[%c0, %c0_0, %c0_1, %c0_2] : memref<1x16x8x32xbf16, #tpu.memory_space<vmem>>, vector<1x16x8x32xbf16>
    %1 = vector.shape_cast %0 : vector<1x16x8x32xbf16> to vector<1x8x2x8x32xbf16>
    %cst = arith.constant dense<0xFF80> : vector<1x8x8x32xbf16>
    %2 = vector.multi_reduction <maximumf>, %1, %cst [2] : vector<1x8x2x8x32xbf16> to vector<1x8x8x32xbf16>
    %3 = vector.extract_strided_slice %2 {offsets = [0, 0, 0, 0], sizes = [1, 8, 8, 16], strides = [1, 1, 1, 1]} : vector<1x8x8x32xbf16> to vector<1x8x8x16xbf16>
    %4 = vector.extract_strided_slice %2 {offsets = [0, 0, 0, 16], sizes = [1, 8, 8, 16], strides = [1, 1, 1, 1]} : vector<1x8x8x32xbf16> to vector<1x8x8x16xbf16>
    %5 = arith.maximumf %3, %4 : vector<1x8x8x16xbf16>
    %cst_3 = arith.constant 0.000000e+00 : bf16
    %6 = vector.broadcast %cst_3 : bf16 to vector<1x1x10x16xbf16>
    %cst_4 = arith.constant 0.000000e+00 : bf16
    %7 = vector.broadcast %cst_4 : bf16 to vector<1x10x1x16xbf16>
    %c0_5 = arith.constant 0 : index
    %c0_6 = arith.constant 0 : index
    %c0_7 = arith.constant 0 : index
    %c0_8 = arith.constant 0 : index
    %8 = vector.load %arg5[%c0_5, %c0_6, %c0_7, %c0_8] : memref<1x10x10x16xbf16, #tpu.memory_space<vmem>>, vector<1x1x10x16xbf16>
    tpu.vector_store %arg5[%c0_5, %c0_6, %c0_7, %c0_8], %6 {strides = array<i32>} : memref<1x10x10x16xbf16, #tpu.memory_space<vmem>>, vector<1x1x10x16xbf16>,
    %c0_9 = arith.constant 0 : index
    %c9 = arith.constant 9 : index
    %c0_10 = arith.constant 0 : index
    %c0_11 = arith.constant 0 : index
    %9 = vector.load %arg5[%c0_9, %c9, %c0_10, %c0_11] : memref<1x10x10x16xbf16, #tpu.memory_space<vmem>>, vector<1x1x10x16xbf16>
    tpu.vector_store %arg5[%c0_9, %c9, %c0_10, %c0_11], %6 {strides = array<i32>} : memref<1x10x10x16xbf16, #tpu.memory_space<vmem>>, vector<1x1x10x16xbf16>,
    %c0_12 = arith.constant 0 : index
    %c0_13 = arith.constant 0 : index
    %c0_14 = arith.constant 0 : index
    %c0_15 = arith.constant 0 : index
    %10 = vector.load %arg5[%c0_12, %c0_13, %c0_14, %c0_15] : memref<1x10x10x16xbf16, #tpu.memory_space<vmem>>, vector<1x10x1x16xbf16>
    tpu.vector_store %arg5[%c0_12, %c0_13, %c0_14, %c0_15], %7 {strides = array<i32>} : memref<1x10x10x16xbf16, #tpu.memory_space<vmem>>, vector<1x10x1x16xbf16>,
    %c0_16 = arith.constant 0 : index
    %c0_17 = arith.constant 0 : index
    %c9_18 = arith.constant 9 : index
    %c0_19 = arith.constant 0 : index
    %11 = vector.load %arg5[%c0_16, %c0_17, %c9_18, %c0_19] : memref<1x10x10x16xbf16, #tpu.memory_space<vmem>>, vector<1x10x1x16xbf16>
    tpu.vector_store %arg5[%c0_16, %c0_17, %c9_18, %c0_19], %7 {strides = array<i32>} : memref<1x10x10x16xbf16, #tpu.memory_space<vmem>>, vector<1x10x1x16xbf16>,
    %c0_20 = arith.constant 0 : index
    %c1 = arith.constant 1 : index
    %c1_21 = arith.constant 1 : index
    %c0_22 = arith.constant 0 : index
    %12 = vector.load %arg5[%c0_20, %c1, %c1_21, %c0_22] : memref<1x10x10x16xbf16, #tpu.memory_space<vmem>>, vector<1x8x8x16xbf16>
    tpu.vector_store %arg5[%c0_20, %c1, %c1_21, %c0_22], %5 {strides = array<i32>} : memref<1x10x10x16xbf16, #tpu.memory_space<vmem>>, vector<1x8x8x16xbf16>,
    %c0_23 = arith.constant 0 : index
    %c0_24 = arith.constant 0 : index
    %c0_25 = arith.constant 0 : index
    %c0_26 = arith.constant 0 : index
    %13 = vector.load %arg5[%c0_23, %c0_24, %c0_25, %c0_26] : memref<1x10x10x16xbf16, #tpu.memory_space<vmem>>, vector<1x8x8x16xbf16>
    %c0_27 = arith.constant 0 : index
    %c0_28 = arith.constant 0 : index
    %c1_29 = arith.constant 1 : index
    %c0_30 = arith.constant 0 : index
    %14 = vector.load %arg5[%c0_27, %c0_28, %c1_29, %c0_30] : memref<1x10x10x16xbf16, #tpu.memory_space<vmem>>, vector<1x8x8x16xbf16>
    %c0_31 = arith.constant 0 : index
    %c0_32 = arith.constant 0 : index
    %c2 = arith.constant 2 : index
    %c0_33 = arith.constant 0 : index
    %15 = vector.load %arg5[%c0_31, %c0_32, %c2, %c0_33] : memref<1x10x10x16xbf16, #tpu.memory_space<vmem>>, vector<1x8x8x16xbf16>
    %c0_34 = arith.constant 0 : index
    %c1_35 = arith.constant 1 : index
    %c0_36 = arith.constant 0 : index
    %c0_37 = arith.constant 0 : index
    %16 = vector.load %arg5[%c0_34, %c1_35, %c0_36, %c0_37] : memref<1x10x10x16xbf16, #tpu.memory_space<vmem>>, vector<1x8x8x16xbf16>
    %c0_38 = arith.constant 0 : index
    %c1_39 = arith.constant 1 : index
    %c1_40 = arith.constant 1 : index
    %c0_41 = arith.constant 0 : index
    %17 = vector.load %arg5[%c0_38, %c1_39, %c1_40, %c0_41] : memref<1x10x10x16xbf16, #tpu.memory_space<vmem>>, vector<1x8x8x16xbf16>
    %c0_42 = arith.constant 0 : index
    %c1_43 = arith.constant 1 : index
    %c2_44 = arith.constant 2 : index
    %c0_45 = arith.constant 0 : index
    %18 = vector.load %arg5[%c0_42, %c1_43, %c2_44, %c0_45] : memref<1x10x10x16xbf16, #tpu.memory_space<vmem>>, vector<1x8x8x16xbf16>
    %c0_46 = arith.constant 0 : index
    %c2_47 = arith.constant 2 : index
    %c0_48 = arith.constant 0 : index
    %c0_49 = arith.constant 0 : index
    %19 = vector.load %arg5[%c0_46, %c2_47, %c0_48, %c0_49] : memref<1x10x10x16xbf16, #tpu.memory_space<vmem>>, vector<1x8x8x16xbf16>
    %c0_50 = arith.constant 0 : index
    %c2_51 = arith.constant 2 : index
    %c1_52 = arith.constant 1 : index
    %c0_53 = arith.constant 0 : index
    %20 = vector.load %arg5[%c0_50, %c2_51, %c1_52, %c0_53] : memref<1x10x10x16xbf16, #tpu.memory_space<vmem>>, vector<1x8x8x16xbf16>
    %c0_54 = arith.constant 0 : index
    %c2_55 = arith.constant 2 : index
    %c2_56 = arith.constant 2 : index
    %c0_57 = arith.constant 0 : index
    %21 = vector.load %arg5[%c0_54, %c2_55, %c2_56, %c0_57] : memref<1x10x10x16xbf16, #tpu.memory_space<vmem>>, vector<1x8x8x16xbf16>
    %22 = tpu.concatenate %13, %14, %15, %16, %17, %18, %19, %20, %21 in 3 : vector<1x8x8x16xbf16>, vector<1x8x8x16xbf16>, vector<1x8x8x16xbf16>, vector<1x8x8x16xbf16>, vector<1x8x8x16xbf16>, vector<1x8x8x16xbf16>, vector<1x8x8x16xbf16>, vector<1x8x8x16xbf16>, vector<1x8x8x16xbf16> -> vector<1x8x8x144xbf16>
    %23 = vector.shape_cast %22 : vector<1x8x8x144xbf16> to vector<64x144xbf16>
    %c0_58 = arith.constant 0 : index
    %c0_59 = arith.constant 0 : index
    %24 = vector.load %arg2[%c0_58, %c0_59] : memref<144x32xbf16, #tpu.memory_space<vmem>>, vector<144x32xbf16>
    %cst_60 = arith.constant dense<0.000000e+00> : vector<64x32xf32>
    %25 = tpu.matmul %23, %24, %cst_60 {dimension_numbers = #tpu.dot_dimension_numbers<[1], [0], [0], [1], [0, 0, 1, 1], [], []>} : vector<64x144xbf16>, vector<144x32xbf16>, vector<64x32xf32> -> vector<64x32xf32>
    %26 = vector.shape_cast %25 : vector<64x32xf32> to vector<1x8x8x32xf32>
    %27 = arith.truncf %26 : vector<1x8x8x32xf32> to vector<1x8x8x32xbf16>
    %c0_61 = arith.constant 0 : index
    %c0_62 = arith.constant 0 : index
    %c0_63 = arith.constant 0 : index
    %c0_64 = arith.constant 0 : index
    %28 = vector.load %arg3[%c0_61, %c0_62, %c0_63, %c0_64] : memref<1x8x8x32xbf16, #tpu.memory_space<vmem>>, vector<1x8x8x32xbf16>
    tpu.vector_store %arg3[%c0_61, %c0_62, %c0_63, %c0_64], %27 {strides = array<i32>} : memref<1x8x8x32xbf16, #tpu.memory_space<vmem>>, vector<1x8x8x32xbf16>,
    %cst_65 = arith.constant dense<0.000000e+00> : vector<32xf32>
    %29 = vector.multi_reduction <add>, %25, %cst_65 [0] : vector<64x32xf32> to vector<32xf32>
    %30 = vector.shape_cast %29 : vector<32xf32> to vector<1x32xf32>
    %31 = arith.mulf %25, %25 : vector<64x32xf32>
    %cst_66 = arith.constant dense<0.000000e+00> : vector<32xf32>
    %32 = vector.multi_reduction <add>, %31, %cst_66 [0] : vector<64x32xf32> to vector<32xf32>
    %33 = vector.shape_cast %32 : vector<32xf32> to vector<1x32xf32>
    %34 = tpu.concatenate %30, %33 in 0 : vector<1x32xf32>, vector<1x32xf32> -> vector<2x32xf32>
    %35 = vector.shape_cast %34 : vector<2x32xf32> to vector<1x2x32xf32>
    %c0_67 = arith.constant 0 : index
    %c0_68 = arith.constant 0 : index
    %c0_69 = arith.constant 0 : index
    %36 = vector.load %arg4[%c0_67, %c0_68, %c0_69] : memref<1x2x32xf32, #tpu.memory_space<vmem>>, vector<1x2x32xf32>
    tpu.vector_store %arg4[%c0_67, %c0_68, %c0_69], %35 {strides = array<i32>} : memref<1x2x32xf32, #tpu.memory_space<vmem>>, vector<1x2x32xf32>,
    return
  }
  func.func @transform_0(%arg0: i32) -> (i32, i32, i32, i32) {
    %c0_i32 = arith.constant 0 : i32
    %c0_i32_0 = arith.constant 0 : i32
    %c0_i32_1 = arith.constant 0 : i32
    %c0_i32_2 = arith.constant 0 : i32
    return %arg0, %c0_i32, %c0_i32_0, %c0_i32_1 : i32, i32, i32, i32
  }
  func.func @transform_1(%arg0: i32) -> (i32, i32) {
    %c0_i32 = arith.constant 0 : i32
    %c0_i32_0 = arith.constant 0 : i32
    %c0_i32_1 = arith.constant 0 : i32
    return %c0_i32, %c0_i32_0 : i32, i32
  }
  func.func @transform_2(%arg0: i32) -> (i32, i32, i32, i32) {
    %c0_i32 = arith.constant 0 : i32
    %c0_i32_0 = arith.constant 0 : i32
    %c0_i32_1 = arith.constant 0 : i32
    %c0_i32_2 = arith.constant 0 : i32
    return %arg0, %c0_i32, %c0_i32_0, %c0_i32_1 : i32, i32, i32, i32
  }
  func.func @transform_3(%arg0: i32) -> (i32, i32, i32) {
    %c0_i32 = arith.constant 0 : i32
    %c0_i32_0 = arith.constant 0 : i32
    %c0_i32_1 = arith.constant 0 : i32
    return %arg0, %c0_i32, %c0_i32_0 : i32, i32, i32
  }
}

</mosaic_0001>

<llo_original>
// kernel: tpu_custom_call.1
$region0: #{tpu_custom_call.1}
  #allocation0 [shape = 'u32[]', space=smem, size = 0x4, offset = 0x4, fixed_abs, tag = 'smem constant byte address 0x4 - core index']
  #allocation1 [shape = 'u32[144,128]{1,0:T(1,128)}', space=vmem, size = 0x12000, scoped, tag = 'internal scratch']
  #allocation2 [shape = 'bf16[1,10,10,16]{3,2,1,0:T(8,128)(2,1)}', space=vmem, size = 0xa000, scoped, tag = 'scratch operand']
  %s0 = inlined_call_operand.hbm [shape: bf16[2,16,8,32], index: 0, kind: input, shape index: {}]
  %s1 = inlined_call_operand.vmem [shape: bf16[144,32], index: 1, kind: input, shape index: {}]
  %s2 = inlined_call_operand.hbm [shape: bf16[2,8,8,32], index: 2, kind: output, shape index: {0}]
  %s3 = inlined_call_operand.hbm [shape: f32[2,2,32], index: 3, kind: output, shape index: {1}]
  %4 = xla_tuple %s2, %s3
  %s5 = sld [smem:[#allocation0]]
  $region53: #{tpu_custom_call.1} parent=0
    _
  %s7 = ssub.s32 1, %s5
  %s8 = scalar_select 0, %s7, %s5
  $region1: #{tpu_custom_call.1} parent=0
    #allocation3 [shape = 'u8[65536]{0}', space=vmem, size = 0x10000, scoped, tag = 'input window, operand 0']
    #allocation4 [shape = 's32[2]{0}', space=sflag, size = 0x8, scoped, tag = 'scoped memory for tpu_custom_call.1']
    #allocation5 [shape = 's32[2]{0}', space=sflag, size = 0x8, scoped, tag = 'scoped memory for tpu_custom_call.1']
    #allocation6 [shape = 'u8[32768]{0}', space=vmem, size = 0x8000, scoped, tag = 'output window, operand 0']
    #allocation7 [shape = 'u8[2048]{0}', space=vmem, size = 0x800, scoped, tag = 'output window, operand 1']
    #allocation8 [shape = 's32[2]{0}', space=sflag, size = 0x8, scoped, tag = 'scoped memory for tpu_custom_call.1']
    %9 = vsyncpa [#allocation4], 0
    %s10 = scalar_lea.sflag [#allocation4], 1
    %11 = vsyncpa %s10, 0
    %12 = vsyncpa [#allocation5], 0
    %s13 = scalar_lea.sflag [#allocation5], 1
    %14 = vsyncpa %s13, 0
    %15 = vsyncpa [#allocation8], 0
    %s16 = scalar_lea.sflag [#allocation8], 1
    %17 = vsyncpa %s16, 0
    loop: start=0, step=1, limit=4
    $region2: #{tpu_custom_call.1} parent=1 // loop_pre_header
      _
    $region3: #{tpu_custom_call.1} parent=1 // loop_header
      %s19 = sphi 0, %s23
      %p20 = scmp.ge.s32.totalorder %s19, 4
      %s29 = sphi 0, %s31
      %s32 = sphi 0, %s29
      %s33 = sphi 0, %s32
      %s49 = sphi 0, %s33
      %s53 = sphi 0, %s53
      %s55 = sphi 0, %s53
      %s56 = sphi 0, %s55
      %s70 = sphi 0, %s56
      %s76 = sphi 0, %s78
      %s79 = sphi 0, %s76
      %s80 = sphi 0, %s79
      %s96 = sphi 0, %s80
      %s102 = sphi 0, %s104
      %s105 = sphi 0, %s102
      %s106 = sphi 0, %s105
      %s122 = sphi 0, %s106
    $region4: #{tpu_custom_call.1} parent=1 // loop_header_branch
      %22 = sbr.rel (%p20) target = $region8
    $region5: #{tpu_custom_call.1} parent=1 // loop_body
      %s24 = ssub.s32 %s19, 1
      %s25 = ssub.s32 %s19, 2
      %s26 = sadd.s32 %s19, 1
      %s27 = ssub.s32 %s19, %s26
      %p28 = scmp.eq.s32.totalorder %s27, 0
      %s30 = sadd.s32 %s29, 1
      %s31 = scalar_select %p28, %s29, %s30
      %p34 = pneg %p28
      %p35 = scmp.eq.s32.totalorder %s19, 1
      %p36 = por %p34, %p35
      %p37 = scmp.ne.s32.totalorder %s29, %s32
      %p38 = scmp.eq.s32.totalorder %s19, 0
      %p39 = por %p37, %p38
      %p40 = scmp.ne.s32.totalorder %s29, %s32
      %p41 = scmp.eq.s32.totalorder %s24, 1
      %p42 = por %p40, %p41
      %p43 = scmp.ne.s32.totalorder %s32, %s33
      %p44 = scmp.eq.s32.totalorder %s24, 0
      %p45 = por %p43, %p44
      %p46 = scmp.ne.s32.totalorder %s32, %s33
      %p47 = scmp.eq.s32.totalorder %s25, 1
      %p48 = por %p46, %p47
      %p50 = scmp.ne.s32.totalorder %s33, %s49
      %p51 = scmp.eq.s32.totalorder %s25, 0
      %p52 = por %p50, %p51
      %s54 = sadd.s32 %s53, 1
      %p57 = scmp.eq.s32.totalorder %s19, 1
      %p58 = scmp.ne.s32.totalorder %s53, %s55
      %p59 = scmp.eq.s32.totalorder %s19, 0
      %p60 = por %p58, %p59
      %p61 = scmp.ne.s32.totalorder %s53, %s55
      %p62 = scmp.eq.s32.totalorder %s24, 1
      %p63 = por %p61, %p62
      %p64 = scmp.ne.s32.totalorder %s55, %s56
      %p65 = scmp.eq.s32.totalorder %s24, 0
      %p66 = por %p64, %p65
      %p67 = scmp.ne.s32.totalorder %s55, %s56
      %p68 = scmp.eq.s32.totalorder %s25, 1
      %p69 = por %p67, %p68
      %p71 = scmp.ne.s32.totalorder %s56, %s70
      %p72 = scmp.eq.s32.totalorder %s25, 0
      %p73 = por %p71, %p72
      %s74 = ssub.s32 %s19, %s26
      %p75 = scmp.eq.s32.totalorder %s74, 0
      %s77 = sadd.s32 %s76, 1
      %s78 = scalar_select %p75, %s76, %s77
      %p81 = pneg %p75
      %p82 = scmp.eq.s32.totalorder %s19, 1
      %p83 = por %p81, %p82
      %p84 = scmp.ne.s32.totalorder %s76, %s79
      %p85 = scmp.eq.s32.totalorder %s19, 0
      %p86 = por %p84, %p85
      %p87 = scmp.ne.s32.totalorder %s76, %s79
      %p88 = scmp.eq.s32.totalorder %s24, 1
      %p89 = por %p87, %p88
      %p90 = scmp.ne.s32.totalorder %s79, %s80
      %p91 = scmp.eq.s32.totalorder %s24, 0
      %p92 = por %p90, %p91
      %p93 = scmp.ne.s32.totalorder %s79, %s80
      %p94 = scmp.eq.s32.totalorder %s25, 1
      %p95 = por %p93, %p94
      %p97 = scmp.ne.s32.totalorder %s80, %s96
      %p98 = scmp.eq.s32.totalorder %s25, 0
      %p99 = por %p97, %p98
      %s100 = ssub.s32 %s19, %s26
      %p101 = scmp.eq.s32.totalorder %s100, 0
      %s103 = sadd.s32 %s102, 1
      %s104 = scalar_select %p101, %s102, %s103
      %p107 = pneg %p101
      %p108 = scmp.eq.s32.totalorder %s19, 1
      %p109 = por %p107, %p108
      %p110 = scmp.ne.s32.totalorder %s102, %s105
      %p111 = scmp.eq.s32.totalorder %s19, 0
      %p112 = por %p110, %p111
      %p113 = scmp.ne.s32.totalorder %s102, %s105
      %p114 = scmp.eq.s32.totalorder %s24, 1
      %p115 = por %p113, %p114
      %p116 = scmp.ne.s32.totalorder %s105, %s106
      %p117 = scmp.eq.s32.totalorder %s24, 0
      %p118 = por %p116, %p117
      %p119 = scmp.ne.s32.totalorder %s105, %s106
      %p120 = scmp.eq.s32.totalorder %s25, 1
      %p121 = por %p119, %p120
      %p123 = scmp.ne.s32.totalorder %s106, %s122
      %p124 = scmp.eq.s32.totalorder %s25, 0
      %p125 = por %p123, %p124
      %p126 = scmp.le.s32.totalorder 1, %s19
      %p127 = scmp.lt.s32.totalorder %s19, 3
      %p128 = pnand %p126, %p127
      %p129 = pneg %p128
      // Predicated region
      $region9: #{tpu_custom_call.1} parent=5 // pred_check
        _
      $region10: #{tpu_custom_call.1} parent=5 // pred_check_branch
        %131 = sbr.rel (%p128) target = $region12
      $region11: #{tpu_custom_call.1} parent=5 // pred_region
        %s132 = ssub.s32 %s19, 1
        // Predicated region
        $region13: #{tpu_custom_call.1} parent=11 // pred_check
          %p133 = pneg %p66
        $region14: #{tpu_custom_call.1} parent=11 // pred_check_branch
          %135 = sbr.rel (%p133) target = $region16
        $region15: #{tpu_custom_call.1} parent=11 // pred_region
          _
        $region16: #{tpu_custom_call.1} parent=11 // pred_fallthru
          _
      $region12: #{tpu_custom_call.1} parent=5 // pred_fallthru
        _
      %p136 = scmp.lt.s32.totalorder %s19, 2
      // Predicated region
      $region17: #{tpu_custom_call.1} parent=5 // pred_check
        %p137 = pneg %p136
      $region18: #{tpu_custom_call.1} parent=5 // pred_check_branch
        %139 = sbr.rel (%p137) target = $region20
      $region19: #{tpu_custom_call.1} parent=5 // pred_region
        // Predicated region
        $region21: #{tpu_custom_call.1} parent=19 // pred_check
          %p140 = pneg %p39
        $region22: #{tpu_custom_call.1} parent=19 // pred_check_branch
          %142 = sbr.rel (%p140) target = $region24
        $region23: #{tpu_custom_call.1} parent=19 // pred_region
          %s143 = sand.u32 %s29, 1
          %s144 = scalar_lea.sflag [#allocation4], %s143
          %s145 = sand.u32 %s29, 1
          %s146 = smul.addr %s145, 64
          %s147 = scalar_lea.vmem [#allocation3], %s146
          %s149 = ssub.s32 1024, 1024
          %150 = vsyncadd %s144, %s149
          %s151 = smul.addr %s19, 16
          %s152 = smul.addr %s151, 64
          %s153 = scalar_lea.hbm %s0, %s152
          %s154 = sshll.u32 %s147, 4
          %s155 = int_to_ptr.vmem [resolvable:$true] %s154
          %160 = dma.hbm_to_vmem [thread:$0]  %s153, 1024, %s155, %s144, 64, 64, 4
        $region24: #{tpu_custom_call.1} parent=19 // pred_fallthru
          _
      $region20: #{tpu_custom_call.1} parent=5 // pred_fallthru
        _
      %p161 = scmp.le.s32.totalorder 1, %s19
      %p162 = scmp.lt.s32.totalorder %s19, 3
      %p163 = pnand %p161, %p162
      %p164 = pneg %p163
      // Predicated region
      $region25: #{tpu_custom_call.1} parent=5 // pred_check
        _
      $region26: #{tpu_custom_call.1} parent=5 // pred_check_branch
        %166 = sbr.rel (%p163) target = $region28
      $region27: #{tpu_custom_call.1} parent=5 // pred_region
        %s167 = ssub.s32 %s19, 1
        %s168 = sand.u32 %s32, 1
        %s169 = scalar_lea.sflag [#allocation4], %s168
        %s170 = sand.u32 %s32, 1
        %s171 = smul.addr %s170, 64
        %s172 = scalar_lea.vmem [#allocation3], %s171
        // Predicated region
        $region29: #{tpu_custom_call.1} parent=27 // pred_check
          %p173 = pneg %p45
        $region30: #{tpu_custom_call.1} parent=27 // pred_check_branch
          %175 = sbr.rel (%p173) target = $region32
        $region31: #{tpu_custom_call.1} parent=27 // pred_region
          %176 = dma.done %s169, 1024
        $region32: #{tpu_custom_call.1} parent=27 // pred_fallthru
          _
        %s177 = sand.u32 %s32, 1
        %s178 = scalar_lea.sflag [#allocation4], %s177
        %s179 = sand.u32 %s32, 1
        %s180 = smul.addr %s179, 64
        %s181 = scalar_lea.vmem [#allocation3], %s180
        %p182 = pneg %p45
        %p183 = pneg %p42
        %p184 = pneg %p66
        %p185 = pneg %p63
        %p186 = pneg %p92
        %p187 = pneg %p89
        %s188 = sand.u32 %s79, 1
        %s189 = scalar_lea.sflag [#allocation5], %s188
        %s190 = sand.u32 %s79, 1
        %s191 = smul.addr %s190, 32
        %s192 = scalar_lea.vmem [#allocation6], %s191
        %p193 = pneg %p118
        %p194 = pneg %p115
        %s195 = sand.u32 %s105, 1
        %s196 = scalar_lea.sflag [#allocation8], %s195
        %s197 = sand.u32 %s105, 1
        %s198 = smul.addr %s197, 2
        %s199 = scalar_lea.vmem [#allocation7], %s198
        %v202 = vld [vmem:[%s172] sm:$0xf]
        %v203 = vld [vmem:[%s172 + $0x4] sm:$0xf]
        %v204 = vld [vmem:[%s172 + $0x8] sm:$0xf]
        %v205 = vld [vmem:[%s172 + $0xc] sm:$0xf]
        %v206 = vld [vmem:[%s172 + $0x10] sm:$0xf]
        %v207 = vld [vmem:[%s172 + $0x14] sm:$0xf]
        %v208 = vld [vmem:[%s172 + $0x18] sm:$0xf]
        %v209 = vld [vmem:[%s172 + $0x1c] sm:$0xf]
        %v210 = vld [vmem:[%s172 + $0x20] sm:$0xf]
        %v211 = vld [vmem:[%s172 + $0x24] sm:$0xf]
        %v212 = vld [vmem:[%s172 + $0x28] sm:$0xf]
        %v213 = vld [vmem:[%s172 + $0x2c] sm:$0xf]
        %v214 = vld [vmem:[%s172 + $0x30] sm:$0xf]
        %v215 = vld [vmem:[%s172 + $0x34] sm:$0xf]
        %v216 = vld [vmem:[%s172 + $0x38] sm:$0xf]
        %v217 = vld [vmem:[%s172 + $0x3c] sm:$0xf]
        %vm218 = vcmask 257024
        %v221 = vsel %vm218, %v202, 4286644096
        %v224 = vsel %vm218, %v203, 4286644096
        %v226 = vmax.bf16 %v221, %v224
        %v228 = vsel %vm218, %v204, 4286644096
        %v231 = vsel %vm218, %v205, 4286644096
        %v233 = vmax.bf16 %v228, %v231
        %v235 = vsel %vm218, %v206, 4286644096
        %v238 = vsel %vm218, %v207, 4286644096
        %v240 = vmax.bf16 %v235, %v238
        %v242 = vsel %vm218, %v208, 4286644096
        %v245 = vsel %vm218, %v209, 4286644096
        %v247 = vmax.bf16 %v242, %v245
        %v249 = vsel %vm218, %v210, 4286644096
        %v252 = vsel %vm218, %v211, 4286644096
        %v254 = vmax.bf16 %v249, %v252
        %v256 = vsel %vm218, %v212, 4286644096
        %v259 = vsel %vm218, %v213, 4286644096
        %v261 = vmax.bf16 %v256, %v259
        %v263 = vsel %vm218, %v214, 4286644096
        %v266 = vsel %vm218, %v215, 4286644096
        %v268 = vmax.bf16 %v263, %v266
        %v270 = vsel %vm218, %v216, 4286644096
        %v273 = vsel %vm218, %v217, 4286644096
        %v275 = vmax.bf16 %v270, %v273
        %284 = vrot.lane.b32.xlu0 %v226, 112
        %v285 = vpop.permute.xlu0 %284
        %286 = vrot.lane.b32.xlu0 %v233, 112
        %v287 = vpop.permute.xlu0 %286
        %288 = vrot.lane.b32.xlu0 %v240, 112
        %v289 = vpop.permute.xlu0 %288
        %290 = vrot.lane.b32.xlu0 %v247, 112
        %v291 = vpop.permute.xlu0 %290
        %292 = vrot.lane.b32.xlu0 %v254, 112
        %v293 = vpop.permute.xlu0 %292
        %294 = vrot.lane.b32.xlu0 %v261, 112
        %v295 = vpop.permute.xlu0 %294
        %296 = vrot.lane.b32.xlu0 %v268, 112
        %v297 = vpop.permute.xlu0 %296
        %298 = vrot.lane.b32.xlu0 %v275, 112
        %v299 = vpop.permute.xlu0 %298
        %v308 = vmax.bf16 %v226, %v285
        %v309 = vmax.bf16 %v233, %v287
        %v310 = vmax.bf16 %v240, %v289
        %v311 = vmax.bf16 %v247, %v291
        %v312 = vmax.bf16 %v254, %v293
        %v313 = vmax.bf16 %v261, %v295
        %v314 = vmax.bf16 %v268, %v297
        %v315 = vmax.bf16 %v275, %v299
        %vm316 = vcmask 125952
        %317 = vst.msk [vmem:[#allocation2] sm:$0xf] %vm316, 0
        %vm318 = vcmask 122880
        %319 = vst.msk [vmem:[#allocation2 + $0x4] sm:$0x1] %vm318, 0
        %s320 = scalar_lea.vmem [#allocation2], 72
        %321 = vst.msk [vmem:[%s320] sm:$0xf] %vm316, 0
        %322 = vst.msk [vmem:[%s320 + $0x4] sm:$0x1] %vm318, 0
        %vm323 = vcmask 122880
        %vm324 = vsmask.f32 256
        %vm325 = vmand %vm323, %vm324
        %v326 = vld [vmem:[#allocation2] sm:$0x1]
        %v327 = vsel %vm325, 0, %v326
        %328 = vst [vmem:[#allocation2] sm:$0x1] %v327
        %v329 = vld [vmem:[#allocation2 + $0x8] sm:$0x1]
        %v330 = vsel %vm325, 0, %v329
        %331 = vst [vmem:[#allocation2 + $0x8] sm:$0x1] %v330
        %v332 = vld [vmem:[#allocation2 + $0x10] sm:$0x1]
        %v333 = vsel %vm325, 0, %v332
        %334 = vst [vmem:[#allocation2 + $0x10] sm:$0x1] %v333
        %v335 = vld [vmem:[#allocation2 + $0x18] sm:$0x1]
        %v336 = vsel %vm325, 0, %v335
        %337 = vst [vmem:[#allocation2 + $0x18] sm:$0x1] %v336
        %v338 = vld [vmem:[#allocation2 + $0x20] sm:$0x1]
        %v339 = vsel %vm325, 0, %v338
        %340 = vst [vmem:[#allocation2 + $0x20] sm:$0x1] %v339
        %v341 = vld [vmem:[#allocation2 + $0x28] sm:$0x1]
        %v342 = vsel %vm325, 0, %v341
        %343 = vst [vmem:[#allocation2 + $0x28] sm:$0x1] %v342
        %v344 = vld [vmem:[#allocation2 + $0x30] sm:$0x1]
        %v345 = vsel %vm325, 0, %v344
        %346 = vst [vmem:[#allocation2 + $0x30] sm:$0x1] %v345
        %v347 = vld [vmem:[#allocation2 + $0x38] sm:$0x1]
        %v348 = vsel %vm325, 0, %v347
        %349 = vst [vmem:[#allocation2 + $0x38] sm:$0x1] %v348
        %v350 = vld [vmem:[#allocation2 + $0x40] sm:$0x1]
        %v351 = vsel %vm325, 0, %v350
        %352 = vst [vmem:[#allocation2 + $0x40] sm:$0x1] %v351
        %v353 = vld [vmem:[#allocation2 + $0x48] sm:$0x1]
        %v354 = vsel %vm325, 0, %v353
        %355 = vst [vmem:[#allocation2 + $0x48] sm:$0x1] %v354
        %vm356 = vsmask.f32 7938
        %vm357 = vmand %vm323, %vm356
        %v358 = vld [vmem:[#allocation2 + $0x4] sm:$0x1]
        %v359 = vsel %vm357, 0, %v358
        %360 = vst [vmem:[#allocation2 + $0x4] sm:$0x1] %v359
        %v361 = vld [vmem:[#allocation2 + $0xc] sm:$0x1]
        %v362 = vsel %vm357, 0, %v361
        %363 = vst [vmem:[#allocation2 + $0xc] sm:$0x1] %v362
        %v364 = vld [vmem:[#allocation2 + $0x14] sm:$0x1]
        %v365 = vsel %vm357, 0, %v364
        %366 = vst [vmem:[#allocation2 + $0x14] sm:$0x1] %v365
        %v367 = vld [vmem:[#allocation2 + $0x1c] sm:$0x1]
        %v368 = vsel %vm357, 0, %v367
        %369 = vst [vmem:[#allocation2 + $0x1c] sm:$0x1] %v368
        %v370 = vld [vmem:[#allocation2 + $0x24] sm:$0x1]
        %v371 = vsel %vm357, 0, %v370
        %372 = vst [vmem:[#allocation2 + $0x24] sm:$0x1] %v371
        %v373 = vld [vmem:[#allocation2 + $0x2c] sm:$0x1]
        %v374 = vsel %vm357, 0, %v373
        %375 = vst [vmem:[#allocation2 + $0x2c] sm:$0x1] %v374
        %v376 = vld [vmem:[#allocation2 + $0x34] sm:$0x1]
        %v377 = vsel %vm357, 0, %v376
        %378 = vst [vmem:[#allocation2 + $0x34] sm:$0x1] %v377
        %v379 = vld [vmem:[#allocation2 + $0x3c] sm:$0x1]
        %v380 = vsel %vm357, 0, %v379
        %381 = vst [vmem:[#allocation2 + $0x3c] sm:$0x1] %v380
        %v382 = vld [vmem:[#allocation2 + $0x44] sm:$0x1]
        %v383 = vsel %vm357, 0, %v382
        %384 = vst [vmem:[#allocation2 + $0x44] sm:$0x1] %v383
        %v385 = vld [vmem:[#allocation2 + $0x4c] sm:$0x1]
        %v386 = vsel %vm357, 0, %v385
        %387 = vst [vmem:[#allocation2 + $0x4c] sm:$0x1] %v386
        %v389 = vshrl.u32 %v308, 16
        %v391 = vrot.slane %v389, 7
        %v392 = vshll.u32 %v308, 16
        %v394 = vor.u32 %v391, %v392
        %v395 = vrot.slane %v391, 4
        %v397 = vshrl.u32 %v309, 16
        %v399 = vrot.slane %v397, 7
        %v400 = vshll.u32 %v309, 16
        %v402 = vor.u32 %v399, %v400
        %v403 = vrot.slane %v399, 4
        %v405 = vshrl.u32 %v310, 16
        %v407 = vrot.slane %v405, 7
        %v408 = vshll.u32 %v310, 16
        %v410 = vor.u32 %v407, %v408
        %v411 = vrot.slane %v407, 4
        %v413 = vshrl.u32 %v311, 16
        %v415 = vrot.slane %v413, 7
        %v416 = vshll.u32 %v311, 16
        %v418 = vor.u32 %v415, %v416
        %v419 = vrot.slane %v415, 4
        %v421 = vshrl.u32 %v312, 16
        %v423 = vrot.slane %v421, 7
        %v424 = vshll.u32 %v312, 16
        %v426 = vor.u32 %v423, %v424
        %v427 = vrot.slane %v423, 4
        %v429 = vshrl.u32 %v313, 16
        %v431 = vrot.slane %v429, 7
        %v432 = vshll.u32 %v313, 16
        %v434 = vor.u32 %v431, %v432
        %v435 = vrot.slane %v431, 4
        %v437 = vshrl.u32 %v314, 16
        %v439 = vrot.slane %v437, 7
        %v440 = vshll.u32 %v314, 16
        %v442 = vor.u32 %v439, %v440
        %v443 = vrot.slane %v439, 4
        %v445 = vshrl.u32 %v315, 16
        %v447 = vrot.slane %v445, 7
        %v448 = vshll.u32 %v315, 16
        %v450 = vor.u32 %v447, %v448
        %v451 = vrot.slane %v447, 4
        %s468 = scalar_lea.vmem [#allocation2], 8
        %vm469 = vcmask 125952
        %vm470 = vmand %vm469, %vm356
        %v471 = vld [vmem:[%s468] sm:$0xf]
        %v472 = vsel %vm470, %v394, %v471
        %473 = vst [vmem:[%s468] sm:$0xf] %v472
        %v474 = vld [vmem:[%s468 + $0x4] sm:$0x1]
        %v475 = vsel %vm325, %v395, %v474
        %476 = vst [vmem:[%s468 + $0x4] sm:$0x1] %v475
        %v477 = vld [vmem:[%s468 + $0x8] sm:$0xf]
        %v478 = vsel %vm470, %v402, %v477
        %479 = vst [vmem:[%s468 + $0x8] sm:$0xf] %v478
        %v480 = vld [vmem:[%s468 + $0xc] sm:$0x1]
        %v481 = vsel %vm325, %v403, %v480
        %482 = vst [vmem:[%s468 + $0xc] sm:$0x1] %v481
        %v483 = vld [vmem:[%s468 + $0x10] sm:$0xf]
        %v484 = vsel %vm470, %v410, %v483
        %485 = vst [vmem:[%s468 + $0x10] sm:$0xf] %v484
        %v486 = vld [vmem:[%s468 + $0x14] sm:$0x1]
        %v487 = vsel %vm325, %v411, %v486
        %488 = vst [vmem:[%s468 + $0x14] sm:$0x1] %v487
        %v489 = vld [vmem:[%s468 + $0x18] sm:$0xf]
        %v490 = vsel %vm470, %v418, %v489
        %491 = vst [vmem:[%s468 + $0x18] sm:$0xf] %v490
        %v492 = vld [vmem:[%s468 + $0x1c] sm:$0x1]
        %v493 = vsel %vm325, %v419, %v492
        %494 = vst [vmem:[%s468 + $0x1c] sm:$0x1] %v493
        %v495 = vld [vmem:[%s468 + $0x20] sm:$0xf]
        %v496 = vsel %vm470, %v426, %v495
        %497 = vst [vmem:[%s468 + $0x20] sm:$0xf] %v496
        %v498 = vld [vmem:[%s468 + $0x24] sm:$0x1]
        %v499 = vsel %vm325, %v427, %v498
        %500 = vst [vmem:[%s468 + $0x24] sm:$0x1] %v499
        %v501 = vld [vmem:[%s468 + $0x28] sm:$0xf]
        %v502 = vsel %vm470, %v434, %v501
        %503 = vst [vmem:[%s468 + $0x28] sm:$0xf] %v502
        %v504 = vld [vmem:[%s468 + $0x2c] sm:$0x1]
        %v505 = vsel %vm325, %v435, %v504
        %506 = vst [vmem:[%s468 + $0x2c] sm:$0x1] %v505
        %v507 = vld [vmem:[%s468 + $0x30] sm:$0xf]
        %v508 = vsel %vm470, %v442, %v507
        %509 = vst [vmem:[%s468 + $0x30] sm:$0xf] %v508
        %v510 = vld [vmem:[%s468 + $0x34] sm:$0x1]
        %v511 = vsel %vm325, %v443, %v510
        %512 = vst [vmem:[%s468 + $0x34] sm:$0x1] %v511
        %v513 = vld [vmem:[%s468 + $0x38] sm:$0xf]
        %v514 = vsel %vm470, %v450, %v513
        %515 = vst [vmem:[%s468 + $0x38] sm:$0xf] %v514
        %v516 = vld [vmem:[%s468 + $0x3c] sm:$0x1]
        %v517 = vsel %vm325, %v451, %v516
        %518 = vst [vmem:[%s468 + $0x3c] sm:$0x1] %v517
        %v519 = vld [vmem:[#allocation2] sm:$0xf]
        %v520 = vld [vmem:[#allocation2 + $0x8] sm:$0xf]
        %v521 = vld [vmem:[#allocation2 + $0x10] sm:$0xf]
        %v522 = vld [vmem:[#allocation2 + $0x18] sm:$0xf]
        %v523 = vld [vmem:[#allocation2 + $0x20] sm:$0xf]
        %v524 = vld [vmem:[#allocation2 + $0x28] sm:$0xf]
        %v525 = vld [vmem:[#allocation2 + $0x30] sm:$0xf]
        %v526 = vld [vmem:[#allocation2 + $0x38] sm:$0xf]
        %v527 = vld [vmem:[#allocation2 + $0x4] sm:$0x1]
        %v528 = vld [vmem:[#allocation2 + $0xc] sm:$0x1]
        %v529 = vld [vmem:[#allocation2 + $0x14] sm:$0x1]
        %v530 = vld [vmem:[#allocation2 + $0x1c] sm:$0x1]
        %v531 = vld [vmem:[#allocation2 + $0x24] sm:$0x1]
        %v532 = vld [vmem:[#allocation2 + $0x2c] sm:$0x1]
        %v533 = vld [vmem:[#allocation2 + $0x34] sm:$0x1]
        %v534 = vld [vmem:[#allocation2 + $0x3c] sm:$0x1]
        %v535 = vld [vmem:[#allocation2] sm:$0xe]
        %v536 = vld [vmem:[#allocation2 + $0x8] sm:$0xe]
        %v537 = vld [vmem:[#allocation2 + $0x10] sm:$0xe]
        %v538 = vld [vmem:[#allocation2 + $0x18] sm:$0xe]
        %v539 = vld [vmem:[#allocation2 + $0x20] sm:$0xe]
        %v540 = vld [vmem:[#allocation2 + $0x28] sm:$0xe]
        %v541 = vld [vmem:[#allocation2 + $0x30] sm:$0xe]
        %v542 = vld [vmem:[#allocation2 + $0x38] sm:$0xe]
        %v543 = vld [vmem:[%s468] sm:$0xf]
        %v544 = vld [vmem:[%s468 + $0x8] sm:$0xf]
        %v545 = vld [vmem:[%s468 + $0x10] sm:$0xf]
        %v546 = vld [vmem:[%s468 + $0x18] sm:$0xf]
        %v547 = vld [vmem:[%s468 + $0x20] sm:$0xf]
        %v548 = vld [vmem:[%s468 + $0x28] sm:$0xf]
        %v549 = vld [vmem:[%s468 + $0x30] sm:$0xf]
        %v550 = vld [vmem:[%s468 + $0x38] sm:$0xf]
        %v551 = vld [vmem:[%s468 + $0x4] sm:$0x1]
        %v552 = vld [vmem:[%s468 + $0xc] sm:$0x1]
        %v553 = vld [vmem:[%s468 + $0x14] sm:$0x1]
        %v554 = vld [vmem:[%s468 + $0x1c] sm:$0x1]
        %v555 = vld [vmem:[%s468 + $0x24] sm:$0x1]
        %v556 = vld [vmem:[%s468 + $0x2c] sm:$0x1]
        %v557 = vld [vmem:[%s468 + $0x34] sm:$0x1]
        %v558 = vld [vmem:[%s468 + $0x3c] sm:$0x1]
        %v559 = vld [vmem:[%s468] sm:$0xe]
        %v560 = vld [vmem:[%s468 + $0x8] sm:$0xe]
        %v561 = vld [vmem:[%s468 + $0x10] sm:$0xe]
        %v562 = vld [vmem:[%s468 + $0x18] sm:$0xe]
        %v563 = vld [vmem:[%s468 + $0x20] sm:$0xe]
        %v564 = vld [vmem:[%s468 + $0x28] sm:$0xe]
        %v565 = vld [vmem:[%s468 + $0x30] sm:$0xe]
        %v566 = vld [vmem:[%s468 + $0x38] sm:$0xe]
        %s567 = scalar_lea.vmem [#allocation2], 16
        %v568 = vld [vmem:[%s567] sm:$0xf]
        %v569 = vld [vmem:[%s567 + $0x8] sm:$0xf]
        %v570 = vld [vmem:[%s567 + $0x10] sm:$0xf]
        %v571 = vld [vmem:[%s567 + $0x18] sm:$0xf]
        %v572 = vld [vmem:[%s567 + $0x20] sm:$0xf]
        %v573 = vld [vmem:[%s567 + $0x28] sm:$0xf]
        %v574 = vld [vmem:[%s567 + $0x30] sm:$0xf]
        %v575 = vld [vmem:[%s567 + $0x38] sm:$0xf]
        %v576 = vld [vmem:[%s567 + $0x4] sm:$0x1]
        %v577 = vld [vmem:[%s567 + $0xc] sm:$0x1]
        %v578 = vld [vmem:[%s567 + $0x14] sm:$0x1]
        %v579 = vld [vmem:[%s567 + $0x1c] sm:$0x1]
        %v580 = vld [vmem:[%s567 + $0x24] sm:$0x1]
        %v581 = vld [vmem:[%s567 + $0x2c] sm:$0x1]
        %v582 = vld [vmem:[%s567 + $0x34] sm:$0x1]
        %v583 = vld [vmem:[%s567 + $0x3c] sm:$0x1]
        %v584 = vld [vmem:[%s567] sm:$0xe]
        %v585 = vld [vmem:[%s567 + $0x8] sm:$0xe]
        %v586 = vld [vmem:[%s567 + $0x10] sm:$0xe]
        %v587 = vld [vmem:[%s567 + $0x18] sm:$0xe]
        %v588 = vld [vmem:[%s567 + $0x20] sm:$0xe]
        %v589 = vld [vmem:[%s567 + $0x28] sm:$0xe]
        %v590 = vld [vmem:[%s567 + $0x30] sm:$0xe]
        %v591 = vld [vmem:[%s567 + $0x38] sm:$0xe]
        %v608 = vunpack.c.l.b16 %v519
        %v609 = vunpack.c.l.b16 %v527
        %v610 = vunpack.c.l.b16 %v520
        %v611 = vunpack.c.l.b16 %v528
        %v612 = vunpack.c.l.b16 %v521
        %v613 = vunpack.c.l.b16 %v529
        %v614 = vunpack.c.l.b16 %v522
        %v615 = vunpack.c.l.b16 %v530
        %v616 = vunpack.c.l.b16 %v523
        %v617 = vunpack.c.l.b16 %v531
        %v618 = vunpack.c.l.b16 %v524
        %v619 = vunpack.c.l.b16 %v532
        %v620 = vunpack.c.l.b16 %v525
        %v621 = vunpack.c.l.b16 %v533
        %v622 = vunpack.c.l.b16 %v526
        %v623 = vunpack.c.l.b16 %v534
        %v624 = vpack.c.b16 %v609, %v608
        %v625 = vpack.c.b16 %v611, %v610
        %v626 = vpack.c.b16 %v613, %v612
        %v627 = vpack.c.b16 %v615, %v614
        %v628 = vpack.c.b16 %v617, %v616
        %v629 = vpack.c.b16 %v619, %v618
        %v630 = vpack.c.b16 %v621, %v620
        %v631 = vpack.c.b16 %v623, %v622
        %v633 = vshrl.u32 %v624, 16
        %v635 = vshll.u32 %v624, 16
        %v637 = vrot.slane %v635, 1
        %v638 = vor.u32 %v633, %v637
        %v640 = vshrl.u32 %v625, 16
        %v642 = vshll.u32 %v625, 16
        %v644 = vrot.slane %v642, 1
        %v645 = vor.u32 %v640, %v644
        %v647 = vshrl.u32 %v626, 16
        %v649 = vshll.u32 %v626, 16
        %v651 = vrot.slane %v649, 1
        %v652 = vor.u32 %v647, %v651
        %v654 = vshrl.u32 %v627, 16
        %v656 = vshll.u32 %v627, 16
        %v658 = vrot.slane %v656, 1
        %v659 = vor.u32 %v654, %v658
        %v661 = vshrl.u32 %v628, 16
        %v663 = vshll.u32 %v628, 16
        %v665 = vrot.slane %v663, 1
        %v666 = vor.u32 %v661, %v665
        %v668 = vshrl.u32 %v629, 16
        %v670 = vshll.u32 %v629, 16
        %v672 = vrot.slane %v670, 1
        %v673 = vor.u32 %v668, %v672
        %v675 = vshrl.u32 %v630, 16
        %v677 = vshll.u32 %v630, 16
        %v679 = vrot.slane %v677, 1
        %v680 = vor.u32 %v675, %v679
        %v682 = vshrl.u32 %v631, 16
        %v684 = vshll.u32 %v631, 16
        %v686 = vrot.slane %v684, 1
        %v687 = vor.u32 %v682, %v686
        %688 = vrot.lane.b32.xlu0 %v638, 16
        %v689 = vpop.permute.xlu0 %688
        %690 = vrot.lane.b32.xlu0 %v645, 16
        %v691 = vpop.permute.xlu0 %690
        %692 = vrot.lane.b32.xlu0 %v652, 16
        %v693 = vpop.permute.xlu0 %692
        %694 = vrot.lane.b32.xlu0 %v659, 16
        %v695 = vpop.permute.xlu0 %694
        %696 = vrot.lane.b32.xlu0 %v666, 16
        %v697 = vpop.permute.xlu0 %696
        %698 = vrot.lane.b32.xlu0 %v673, 16
        %v699 = vpop.permute.xlu0 %698
        %700 = vrot.lane.b32.xlu0 %v680, 16
        %v701 = vpop.permute.xlu0 %700
        %702 = vrot.lane.b32.xlu0 %v687, 16
        %v703 = vpop.permute.xlu0 %702
        %v712 = vunpack.c.l.b16 %v535
        %v713 = vunpack.c.l.b16 %v536
        %v714 = vunpack.c.l.b16 %v537
        %v715 = vunpack.c.l.b16 %v538
        %v716 = vunpack.c.l.b16 %v539
        %v717 = vunpack.c.l.b16 %v540
        %v718 = vunpack.c.l.b16 %v541
        %v719 = vunpack.c.l.b16 %v542
        %v720 = vpack.c.b16 %v609, %v712
        %v721 = vpack.c.b16 %v611, %v713
        %v722 = vpack.c.b16 %v613, %v714
        %v723 = vpack.c.b16 %v615, %v715
        %v724 = vpack.c.b16 %v617, %v716
        %v725 = vpack.c.b16 %v619, %v717
        %v726 = vpack.c.b16 %v621, %v718
        %v727 = vpack.c.b16 %v623, %v719
        %v728 = vrot.slane %v720, 1
        %v729 = vrot.slane %v721, 1
        %v730 = vrot.slane %v722, 1
        %v731 = vrot.slane %v723, 1
        %v732 = vrot.slane %v724, 1
        %v733 = vrot.slane %v725, 1
        %v734 = vrot.slane %v726, 1
        %v735 = vrot.slane %v727, 1
        %736 = vrot.lane.b32.xlu0 %v728, 32
        %v737 = vpop.permute.xlu0 %736
        %738 = vrot.lane.b32.xlu0 %v729, 32
        %v739 = vpop.permute.xlu0 %738
        %740 = vrot.lane.b32.xlu0 %v730, 32
        %v741 = vpop.permute.xlu0 %740
        %742 = vrot.lane.b32.xlu0 %v731, 32
        %v743 = vpop.permute.xlu0 %742
        %744 = vrot.lane.b32.xlu0 %v732, 32
        %v745 = vpop.permute.xlu0 %744
        %746 = vrot.lane.b32.xlu0 %v733, 32
        %v747 = vpop.permute.xlu0 %746
        %748 = vrot.lane.b32.xlu0 %v734, 32
        %v749 = vpop.permute.xlu0 %748
        %750 = vrot.lane.b32.xlu0 %v735, 32
        %v751 = vpop.permute.xlu0 %750
        %v760 = vunpack.c.l.b16 %v543
        %v761 = vunpack.c.l.b16 %v544
        %v762 = vunpack.c.l.b16 %v545
        %v763 = vunpack.c.l.b16 %v546
        %v764 = vunpack.c.l.b16 %v547
        %v765 = vunpack.c.l.b16 %v548
        %v766 = vunpack.c.l.b16 %v549
        %v767 = vunpack.c.l.b16 %v550
        %v768 = vpack.c.b16 %v760, %v760
        %v769 = vpack.c.b16 %v761, %v761
        %v770 = vpack.c.b16 %v762, %v762
        %v771 = vpack.c.b16 %v763, %v763
        %v772 = vpack.c.b16 %v764, %v764
        %v773 = vpack.c.b16 %v765, %v765
        %v774 = vpack.c.b16 %v766, %v766
        %v775 = vpack.c.b16 %v767, %v767
        %776 = vrot.lane.b32.xlu0 %v768, 48
        %v777 = vpop.permute.xlu0 %776
        %778 = vrot.lane.b32.xlu0 %v769, 48
        %v779 = vpop.permute.xlu0 %778
        %780 = vrot.lane.b32.xlu0 %v770, 48
        %v781 = vpop.permute.xlu0 %780
        %782 = vrot.lane.b32.xlu0 %v771, 48
        %v783 = vpop.permute.xlu0 %782
        %784 = vrot.lane.b32.xlu0 %v772, 48
        %v785 = vpop.permute.xlu0 %784
        %786 = vrot.lane.b32.xlu0 %v773, 48
        %v787 = vpop.permute.xlu0 %786
        %788 = vrot.lane.b32.xlu0 %v774, 48
        %v789 = vpop.permute.xlu0 %788
        %790 = vrot.lane.b32.xlu0 %v775, 48
        %v791 = vpop.permute.xlu0 %790
        %v800 = vunpack.c.l.b16 %v551
        %v801 = vunpack.c.l.b16 %v552
        %v802 = vunpack.c.l.b16 %v553
        %v803 = vunpack.c.l.b16 %v554
        %v804 = vunpack.c.l.b16 %v555
        %v805 = vunpack.c.l.b16 %v556
        %v806 = vunpack.c.l.b16 %v557
        %v807 = vunpack.c.l.b16 %v558
        %v808 = vpack.c.b16 %v800, %v760
        %v809 = vpack.c.b16 %v801, %v761
        %v810 = vpack.c.b16 %v802, %v762
        %v811 = vpack.c.b16 %v803, %v763
        %v812 = vpack.c.b16 %v804, %v764
        %v813 = vpack.c.b16 %v805, %v765
        %v814 = vpack.c.b16 %v806, %v766
        %v815 = vpack.c.b16 %v807, %v767
        %v817 = vshrl.u32 %v808, 16
        %v819 = vshll.u32 %v808, 16
        %v821 = vrot.slane %v819, 1
        %v822 = vor.u32 %v817, %v821
        %v824 = vshrl.u32 %v809, 16
        %v826 = vshll.u32 %v809, 16
        %v828 = vrot.slane %v826, 1
        %v829 = vor.u32 %v824, %v828
        %v831 = vshrl.u32 %v810, 16
        %v833 = vshll.u32 %v810, 16
        %v835 = vrot.slane %v833, 1
        %v836 = vor.u32 %v831, %v835
        %v838 = vshrl.u32 %v811, 16
        %v840 = vshll.u32 %v811, 16
        %v842 = vrot.slane %v840, 1
        %v843 = vor.u32 %v838, %v842
        %v845 = vshrl.u32 %v812, 16
        %v847 = vshll.u32 %v812, 16
        %v849 = vrot.slane %v847, 1
        %v850 = vor.u32 %v845, %v849
        %v852 = vshrl.u32 %v813, 16
        %v854 = vshll.u32 %v813, 16
        %v856 = vrot.slane %v854, 1
        %v857 = vor.u32 %v852, %v856
        %v859 = vshrl.u32 %v814, 16
        %v861 = vshll.u32 %v814, 16
        %v863 = vrot.slane %v861, 1
        %v864 = vor.u32 %v859, %v863
        %v866 = vshrl.u32 %v815, 16
        %v868 = vshll.u32 %v815, 16
        %v870 = vrot.slane %v868, 1
        %v871 = vor.u32 %v866, %v870
        %872 = vrot.lane.b32.xlu0 %v822, 64
        %v873 = vpop.permute.xlu0 %872
        %874 = vrot.lane.b32.xlu0 %v829, 64
        %v875 = vpop.permute.xlu0 %874
        %876 = vrot.lane.b32.xlu0 %v836, 64
        %v877 = vpop.permute.xlu0 %876
        %878 = vrot.lane.b32.xlu0 %v843, 64
        %v879 = vpop.permute.xlu0 %878
        %880 = vrot.lane.b32.xlu0 %v850, 64
        %v881 = vpop.permute.xlu0 %880
        %882 = vrot.lane.b32.xlu0 %v857, 64
        %v883 = vpop.permute.xlu0 %882
        %884 = vrot.lane.b32.xlu0 %v864, 64
        %v885 = vpop.permute.xlu0 %884
        %886 = vrot.lane.b32.xlu0 %v871, 64
        %v887 = vpop.permute.xlu0 %886
        %v896 = vunpack.c.l.b16 %v559
        %v897 = vunpack.c.l.b16 %v560
        %v898 = vunpack.c.l.b16 %v561
        %v899 = vunpack.c.l.b16 %v562
        %v900 = vunpack.c.l.b16 %v563
        %v901 = vunpack.c.l.b16 %v564
        %v902 = vunpack.c.l.b16 %v565
        %v903 = vunpack.c.l.b16 %v566
        %v904 = vpack.c.b16 %v800, %v896
        %v905 = vpack.c.b16 %v801, %v897
        %v906 = vpack.c.b16 %v802, %v898
        %v907 = vpack.c.b16 %v803, %v899
        %v908 = vpack.c.b16 %v804, %v900
        %v909 = vpack.c.b16 %v805, %v901
        %v910 = vpack.c.b16 %v806, %v902
        %v911 = vpack.c.b16 %v807, %v903
        %v912 = vrot.slane %v904, 1
        %v913 = vrot.slane %v905, 1
        %v914 = vrot.slane %v906, 1
        %v915 = vrot.slane %v907, 1
        %v916 = vrot.slane %v908, 1
        %v917 = vrot.slane %v909, 1
        %v918 = vrot.slane %v910, 1
        %v919 = vrot.slane %v911, 1
        %920 = vrot.lane.b32.xlu0 %v912, 80
        %v921 = vpop.permute.xlu0 %920
        %922 = vrot.lane.b32.xlu0 %v913, 80
        %v923 = vpop.permute.xlu0 %922
        %924 = vrot.lane.b32.xlu0 %v914, 80
        %v925 = vpop.permute.xlu0 %924
        %926 = vrot.lane.b32.xlu0 %v915, 80
        %v927 = vpop.permute.xlu0 %926
        %928 = vrot.lane.b32.xlu0 %v916, 80
        %v929 = vpop.permute.xlu0 %928
        %930 = vrot.lane.b32.xlu0 %v917, 80
        %v931 = vpop.permute.xlu0 %930
        %932 = vrot.lane.b32.xlu0 %v918, 80
        %v933 = vpop.permute.xlu0 %932
        %934 = vrot.lane.b32.xlu0 %v919, 80
        %v935 = vpop.permute.xlu0 %934
        %v944 = vunpack.c.l.b16 %v568
        %v945 = vunpack.c.l.b16 %v569
        %v946 = vunpack.c.l.b16 %v570
        %v947 = vunpack.c.l.b16 %v571
        %v948 = vunpack.c.l.b16 %v572
        %v949 = vunpack.c.l.b16 %v573
        %v950 = vunpack.c.l.b16 %v574
        %v951 = vunpack.c.l.b16 %v575
        %v952 = vpack.c.b16 %v944, %v944
        %v953 = vpack.c.b16 %v945, %v945
        %v954 = vpack.c.b16 %v946, %v946
        %v955 = vpack.c.b16 %v947, %v947
        %v956 = vpack.c.b16 %v948, %v948
        %v957 = vpack.c.b16 %v949, %v949
        %v958 = vpack.c.b16 %v950, %v950
        %v959 = vpack.c.b16 %v951, %v951
        %960 = vrot.lane.b32.xlu0 %v952, 96
        %v961 = vpop.permute.xlu0 %960
        %962 = vrot.lane.b32.xlu0 %v953, 96
        %v963 = vpop.permute.xlu0 %962
        %964 = vrot.lane.b32.xlu0 %v954, 96
        %v965 = vpop.permute.xlu0 %964
        %966 = vrot.lane.b32.xlu0 %v955, 96
        %v967 = vpop.permute.xlu0 %966
        %968 = vrot.lane.b32.xlu0 %v956, 96
        %v969 = vpop.permute.xlu0 %968
        %970 = vrot.lane.b32.xlu0 %v957, 96
        %v971 = vpop.permute.xlu0 %970
        %972 = vrot.lane.b32.xlu0 %v958, 96
        %v973 = vpop.permute.xlu0 %972
        %974 = vrot.lane.b32.xlu0 %v959, 96
        %v975 = vpop.permute.xlu0 %974
        %v984 = vunpack.c.l.b16 %v576
        %v985 = vunpack.c.l.b16 %v577
        %v986 = vunpack.c.l.b16 %v578
        %v987 = vunpack.c.l.b16 %v579
        %v988 = vunpack.c.l.b16 %v580
        %v989 = vunpack.c.l.b16 %v581
        %v990 = vunpack.c.l.b16 %v582
        %v991 = vunpack.c.l.b16 %v583
        %v992 = vpack.c.b16 %v984, %v944
        %v993 = vpack.c.b16 %v985, %v945
        %v994 = vpack.c.b16 %v986, %v946
        %v995 = vpack.c.b16 %v987, %v947
        %v996 = vpack.c.b16 %v988, %v948
        %v997 = vpack.c.b16 %v989, %v949
        %v998 = vpack.c.b16 %v990, %v950
        %v999 = vpack.c.b16 %v991, %v951
        %v1001 = vshrl.u32 %v992, 16
        %v1003 = vshll.u32 %v992, 16
        %v1005 = vrot.slane %v1003, 1
        %v1006 = vor.u32 %v1001, %v1005
        %v1008 = vshrl.u32 %v993, 16
        %v1010 = vshll.u32 %v993, 16
        %v1012 = vrot.slane %v1010, 1
        %v1013 = vor.u32 %v1008, %v1012
        %v1015 = vshrl.u32 %v994, 16
        %v1017 = vshll.u32 %v994, 16
        %v1019 = vrot.slane %v1017, 1
        %v1020 = vor.u32 %v1015, %v1019
        %v1022 = vshrl.u32 %v995, 16
        %v1024 = vshll.u32 %v995, 16
        %v1026 = vrot.slane %v1024, 1
        %v1027 = vor.u32 %v1022, %v1026
        %v1029 = vshrl.u32 %v996, 16
        %v1031 = vshll.u32 %v996, 16
        %v1033 = vrot.slane %v1031, 1
        %v1034 = vor.u32 %v1029, %v1033
        %v1036 = vshrl.u32 %v997, 16
        %v1038 = vshll.u32 %v997, 16
        %v1040 = vrot.slane %v1038, 1
        %v1041 = vor.u32 %v1036, %v1040
        %v1043 = vshrl.u32 %v998, 16
        %v1045 = vshll.u32 %v998, 16
        %v1047 = vrot.slane %v1045, 1
        %v1048 = vor.u32 %v1043, %v1047
        %v1050 = vshrl.u32 %v999, 16
        %v1052 = vshll.u32 %v999, 16
        %v1054 = vrot.slane %v1052, 1
        %v1055 = vor.u32 %v1050, %v1054
        %1056 = vrot.lane.b32.xlu0 %v1006, 112
        %v1057 = vpop.permute.xlu0 %1056
        %1058 = vrot.lane.b32.xlu0 %v1013, 112
        %v1059 = vpop.permute.xlu0 %1058
        %1060 = vrot.lane.b32.xlu0 %v1020, 112
        %v1061 = vpop.permute.xlu0 %1060
        %1062 = vrot.lane.b32.xlu0 %v1027, 112
        %v1063 = vpop.permute.xlu0 %1062
        %1064 = vrot.lane.b32.xlu0 %v1034, 112
        %v1065 = vpop.permute.xlu0 %1064
        %1066 = vrot.lane.b32.xlu0 %v1041, 112
        %v1067 = vpop.permute.xlu0 %1066
        %1068 = vrot.lane.b32.xlu0 %v1048, 112
        %v1069 = vpop.permute.xlu0 %1068
        %1070 = vrot.lane.b32.xlu0 %v1055, 112
        %v1071 = vpop.permute.xlu0 %1070
        %v1080 = vunpack.c.l.b16 %v584
        %v1081 = vunpack.c.l.b16 %v585
        %v1082 = vunpack.c.l.b16 %v586
        %v1083 = vunpack.c.l.b16 %v587
        %v1084 = vunpack.c.l.b16 %v588
        %v1085 = vunpack.c.l.b16 %v589
        %v1086 = vunpack.c.l.b16 %v590
        %v1087 = vunpack.c.l.b16 %v591
        %v1088 = vpack.c.b16 %v984, %v1080
        %v1089 = vpack.c.b16 %v985, %v1081
        %v1090 = vpack.c.b16 %v986, %v1082
        %v1091 = vpack.c.b16 %v987, %v1083
        %v1092 = vpack.c.b16 %v988, %v1084
        %v1093 = vpack.c.b16 %v989, %v1085
        %v1094 = vpack.c.b16 %v990, %v1086
        %v1095 = vpack.c.b16 %v991, %v1087
        %v1096 = vrot.slane %v1088, 1
        %v1097 = vrot.slane %v1089, 1
        %v1098 = vrot.slane %v1090, 1
        %v1099 = vrot.slane %v1091, 1
        %v1100 = vrot.slane %v1092, 1
        %v1101 = vrot.slane %v1093, 1
        %v1102 = vrot.slane %v1094, 1
        %v1103 = vrot.slane %v1095, 1
        %vm1104 = vcmask 130048
        %v1107 = vsel %vm1104, %v519, %v689
        %v1110 = vsel %vm1104, %v520, %v691
        %v1113 = vsel %vm1104, %v521, %v693
        %v1116 = vsel %vm1104, %v522, %v695
        %v1119 = vsel %vm1104, %v523, %v697
        %v1122 = vsel %vm1104, %v524, %v699
        %v1125 = vsel %vm1104, %v525, %v701
        %v1128 = vsel %vm1104, %v526, %v703
        %vm1129 = vcmask 261120
        %v1131 = vsel %vm1129, %v1107, %v737
        %v1133 = vsel %vm1129, %v1110, %v739
        %v1135 = vsel %vm1129, %v1113, %v741
        %v1137 = vsel %vm1129, %v1116, %v743
        %v1139 = vsel %vm1129, %v1119, %v745
        %v1141 = vsel %vm1129, %v1122, %v747
        %v1143 = vsel %vm1129, %v1125, %v749
        %v1145 = vsel %vm1129, %v1128, %v751
        %vm1146 = vcmask 392192
        %v1148 = vsel %vm1146, %v1131, %v777
        %v1150 = vsel %vm1146, %v1133, %v779
        %v1152 = vsel %vm1146, %v1135, %v781
        %v1154 = vsel %vm1146, %v1137, %v783
        %v1156 = vsel %vm1146, %v1139, %v785
        %v1158 = vsel %vm1146, %v1141, %v787
        %v1160 = vsel %vm1146, %v1143, %v789
        %v1162 = vsel %vm1146, %v1145, %v791
        %vm1163 = vcmask 523264
        %v1165 = vsel %vm1163, %v1148, %v873
        %v1167 = vsel %vm1163, %v1150, %v875
        %v1169 = vsel %vm1163, %v1152, %v877
        %v1171 = vsel %vm1163, %v1154, %v879
        %v1173 = vsel %vm1163, %v1156, %v881
        %v1175 = vsel %vm1163, %v1158, %v883
        %v1177 = vsel %vm1163, %v1160, %v885
        %v1179 = vsel %vm1163, %v1162, %v887
        %vm1180 = vcmask 654336
        %v1182 = vsel %vm1180, %v1165, %v921
        %v1184 = vsel %vm1180, %v1167, %v923
        %v1186 = vsel %vm1180, %v1169, %v925
        %v1188 = vsel %vm1180, %v1171, %v927
        %v1190 = vsel %vm1180, %v1173, %v929
        %v1192 = vsel %vm1180, %v1175, %v931
        %v1194 = vsel %vm1180, %v1177, %v933
        %v1196 = vsel %vm1180, %v1179, %v935
        %vm1197 = vcmask 785408
        %v1199 = vsel %vm1197, %v1182, %v961
        %v1201 = vsel %vm1197, %v1184, %v963
        %v1203 = vsel %vm1197, %v1186, %v965
        %v1205 = vsel %vm1197, %v1188, %v967
        %v1207 = vsel %vm1197, %v1190, %v969
        %v1209 = vsel %vm1197, %v1192, %v971
        %v1211 = vsel %vm1197, %v1194, %v973
        %v1213 = vsel %vm1197, %v1196, %v975
        %vm1214 = vcmask 916480
        %v1216 = vsel %vm1214, %v1199, %v1057
        %v1218 = vsel %vm1214, %v1201, %v1059
        %v1220 = vsel %vm1214, %v1203, %v1061
        %v1222 = vsel %vm1214, %v1205, %v1063
        %v1224 = vsel %vm1214, %v1207, %v1065
        %v1226 = vsel %vm1214, %v1209, %v1067
        %v1228 = vsel %vm1214, %v1211, %v1069
        %v1230 = vsel %vm1214, %v1213, %v1071
        %v1239 = vunpack.c.l.b16 %v1216
        %v1240 = vunpack.c.l.b16 %v1096
        %v1241 = vunpack.c.l.b16 %v1218
        %v1242 = vunpack.c.l.b16 %v1097
        %v1243 = vunpack.c.l.b16 %v1220
        %v1244 = vunpack.c.l.b16 %v1098
        %v1245 = vunpack.c.l.b16 %v1222
        %v1246 = vunpack.c.l.b16 %v1099
        %v1247 = vunpack.c.l.b16 %v1224
        %v1248 = vunpack.c.l.b16 %v1100
        %v1249 = vunpack.c.l.b16 %v1226
        %v1250 = vunpack.c.l.b16 %v1101
        %v1251 = vunpack.c.l.b16 %v1228
        %v1252 = vunpack.c.l.b16 %v1102
        %v1253 = vunpack.c.l.b16 %v1230
        %v1254 = vunpack.c.l.b16 %v1103
        %v1255 = vld [vmem:[%s1] sm:$0xf]
        %v1256 = vld [vmem:[%s1 + $0x4] sm:$0xf]
        %v1257 = vld [vmem:[%s1 + $0x8] sm:$0xf]
        %v1258 = vld [vmem:[%s1 + $0xc] sm:$0xf]
        %v1259 = vld [vmem:[%s1 + $0x10] sm:$0xf]
        %v1260 = vld [vmem:[%s1 + $0x14] sm:$0xf]
        %v1261 = vld [vmem:[%s1 + $0x18] sm:$0xf]
        %v1262 = vld [vmem:[%s1 + $0x1c] sm:$0xf]
        %v1263 = vld [vmem:[%s1 + $0x20] sm:$0xf]
        %v1264 = vld [vmem:[%s1 + $0x24] sm:$0xf]
        %v1265 = vld [vmem:[%s1 + $0x28] sm:$0xf]
        %v1266 = vld [vmem:[%s1 + $0x2c] sm:$0xf]
        %v1267 = vld [vmem:[%s1 + $0x30] sm:$0xf]
        %v1268 = vld [vmem:[%s1 + $0x34] sm:$0xf]
        %v1269 = vld [vmem:[%s1 + $0x38] sm:$0xf]
        %v1270 = vld [vmem:[%s1 + $0x3c] sm:$0xf]
        %v1271 = vld [vmem:[%s1 + $0x40] sm:$0xf]
        %v1272 = vld [vmem:[%s1 + $0x44] sm:$0xf]
        %v1273 = vpack.c.b16 %v1241, %v1239
        %v1274 = vpack.c.b16 %v1242, %v1240
        %v1275 = vpack.c.b16 %v1245, %v1243
        %v1276 = vpack.c.b16 %v1246, %v1244
        %v1277 = vpack.c.b16 %v1249, %v1247
        %v1278 = vpack.c.b16 %v1250, %v1248
        %v1279 = vpack.c.b16 %v1253, %v1251
        %v1280 = vpack.c.b16 %v1254, %v1252
        %v1303 = vunpack.c.l.b16 %v1255
        %v1304 = vunpack.c.l.b16 %v1256
        %v1305 = vunpack.c.l.b16 %v1257
        %v1306 = vunpack.c.l.b16 %v1258
        %v1307 = vunpack.c.l.b16 %v1259
        %v1308 = vunpack.c.l.b16 %v1260
        %v1309 = vunpack.c.l.b16 %v1261
        %v1310 = vunpack.c.l.b16 %v1262
        %v1311 = vunpack.c.l.b16 %v1263
        %v1312 = vunpack.c.l.b16 %v1264
        %v1313 = vunpack.c.l.b16 %v1265
        %v1314 = vunpack.c.l.b16 %v1266
        %v1315 = vunpack.c.l.b16 %v1267
        %v1316 = vunpack.c.l.b16 %v1268
        %v1317 = vunpack.c.l.b16 %v1269
        %v1318 = vunpack.c.l.b16 %v1270
        %v1319 = vunpack.c.l.b16 %v1271
        %v1320 = vunpack.c.l.b16 %v1272
        %v1321 = vpack.c.b16 %v1304, %v1303
        %v1322 = vpack.c.b16 %v1306, %v1305
        %v1323 = vpack.c.b16 %v1308, %v1307
        %v1324 = vpack.c.b16 %v1310, %v1309
        %v1325 = vpack.c.b16 %v1312, %v1311
        %v1326 = vpack.c.b16 %v1314, %v1313
        %v1327 = vpack.c.b16 %v1316, %v1315
        %v1328 = vpack.c.b16 %v1318, %v1317
        %v1329 = vpack.c.b16 %v1320, %v1319
        %v1340 = vsel %vm1104, %v1274, 0
        %v1343 = vsel %vm1104, %v1276, 0
        %v1346 = vsel %vm1104, %v1278, 0
        %v1349 = vsel %vm1104, %v1280, 0
        %1351 = vmatprep.subr.bf16.mxu0 0
        %1352 = vmatpush1.bf16.msra.mxu0 %v1321
        %1353 = vmatprep.subr.bf16.mxu0 0
        %1354 = vmatpush1.bf16.msra.mxu0 %v1322
        %1355 = vmatprep.subr.bf16.mxu0 0
        %1356 = vmatpush1.bf16.msra.mxu0 %v1323
        %1357 = vmatprep.subr.bf16.mxu0 0
        %1358 = vmatpush1.bf16.msra.mxu0 %v1324
        %1359 = vmatprep.subr.bf16.mxu0 0
        %1360 = vmatpush1.bf16.msra.mxu0 %v1325
        %1361 = vmatprep.subr.bf16.mxu0 0
        %1362 = vmatpush1.bf16.msra.mxu0 %v1326
        %1363 = vmatprep.subr.bf16.mxu0 0
        %1364 = vmatpush1.bf16.msra.mxu0 %v1327
        %1365 = vmatprep.subr.bf16.mxu0 0
        %1366 = vmatpush1.bf16.msra.mxu0 %v1328
        %1367 = vmatprep.subr.bf16.mxu0 0
        %1368 = vmatpush1.bf16.msra.mxu0 %v1329
        %1369 = vmatprep.subr.bf16.mxu0 0
        %1370 = vmatpush1.bf16.msra.mxu0 0
        %1371 = vmatprep.subr.bf16.mxu0 0
        %1372 = vmatpush1.bf16.msra.mxu0 0
        %1373 = vmatprep.subr.bf16.mxu0 0
        %1374 = vmatpush1.bf16.msra.mxu0 0
        %1375 = vmatprep.subr.bf16.mxu0 0
        %1376 = vmatpush1.bf16.msra.mxu0 0
        %1377 = vmatprep.subr.bf16.mxu0 0
        %1378 = vmatpush1.bf16.msra.mxu0 0
        %1379 = vmatprep.subr.bf16.mxu0 0
        %1380 = vmatpush1.bf16.msra.mxu0 0
        %1381 = vmatprep.subr.bf16.mxu0 0
        %1382 = vmatpush1.bf16.msra.mxu0 0
        %1383 = vmatprep.mubr.bf16.mxu0 %v1340
        %1384 = vmatmul.mubr.bf16.gmra.mrb[0].mxu0 %v1273
        %v1385 = vpop.f32.mrb[0].mxu0
        %v1386 = vadd.f32 0.0, %v1385
        %v1387 = vpop.f32.mrb[0].mxu0
        %v1388 = vpop.f32.mrb[0].mxu0
        %v1389 = vadd.f32 0.0, %v1388
        %v1390 = vpop.f32.mrb[0].mxu0
        %1391 = vmatprep.mubr.bf16.mxu0 %v1343
        %1392 = vmatmul.mubr.bf16.gmra.mrb[0].mxu0 %v1275
        %v1393 = vpop.f32.mrb[0].mxu0
        %v1394 = vadd.f32 0.0, %v1393
        %v1395 = vpop.f32.mrb[0].mxu0
        %v1396 = vpop.f32.mrb[0].mxu0
        %v1397 = vadd.f32 0.0, %v1396
        %v1398 = vpop.f32.mrb[0].mxu0
        %1399 = vmatprep.mubr.bf16.mxu0 %v1346
        %1400 = vmatmul.mubr.bf16.gmra.mrb[0].mxu0 %v1277
        %v1401 = vpop.f32.mrb[0].mxu0
        %v1402 = vadd.f32 0.0, %v1401
        %v1403 = vpop.f32.mrb[0].mxu0
        %v1404 = vpop.f32.mrb[0].mxu0
        %v1405 = vadd.f32 0.0, %v1404
        %v1406 = vpop.f32.mrb[0].mxu0
        %1407 = vmatprep.mubr.bf16.mxu0 %v1349
        %1408 = vmatmul.mubr.bf16.gmra.mrb[0].mxu0 %v1279
        %v1409 = vpop.f32.mrb[0].mxu0
        %v1410 = vadd.f32 0.0, %v1409
        %v1411 = vpop.f32.mrb[0].mxu0
        %v1412 = vpop.f32.mrb[0].mxu0
        %v1413 = vadd.f32 0.0, %v1412
        %v1414 = vpop.f32.mrb[0].mxu0
        %1415 = vdwg.mxu0
        %v1416 = vpack.c.bf16 %v1386, %v1386
        %v1417 = vpack.c.bf16 %v1389, %v1389
        %v1418 = vpack.c.bf16 %v1394, %v1394
        %v1419 = vpack.c.bf16 %v1397, %v1397
        %v1420 = vpack.c.bf16 %v1402, %v1402
        %v1421 = vpack.c.bf16 %v1405, %v1405
        %v1422 = vpack.c.bf16 %v1410, %v1410
        %v1423 = vpack.c.bf16 %v1413, %v1413
        %1424 = vst.msk [vmem:[%s192] sm:$0xf] %vm218, %v1416
        %1425 = vst.msk [vmem:[%s192 + $0x4] sm:$0xf] %vm218, %v1417
        %1426 = vst.msk [vmem:[%s192 + $0x8] sm:$0xf] %vm218, %v1418
        %1427 = vst.msk [vmem:[%s192 + $0xc] sm:$0xf] %vm218, %v1419
        %1428 = vst.msk [vmem:[%s192 + $0x10] sm:$0xf] %vm218, %v1420
        %1429 = vst.msk [vmem:[%s192 + $0x14] sm:$0xf] %vm218, %v1421
        %1430 = vst.msk [vmem:[%s192 + $0x18] sm:$0xf] %vm218, %v1422
        %1431 = vst.msk [vmem:[%s192 + $0x1c] sm:$0xf] %vm218, %v1423
        %v1432 = vsel %vm1129, %v1386, 0.0
        %v1433 = vsel %vm1129, %v1389, 0.0
        %v1434 = vadd.f32 %v1432, %v1433
        %v1435 = vsel %vm1129, %v1394, 0.0
        %v1436 = vadd.f32 %v1434, %v1435
        %v1437 = vsel %vm1129, %v1397, 0.0
        %v1438 = vadd.f32 %v1436, %v1437
        %v1439 = vsel %vm1129, %v1402, 0.0
        %v1440 = vadd.f32 %v1438, %v1439
        %v1441 = vsel %vm1129, %v1405, 0.0
        %v1442 = vadd.f32 %v1440, %v1441
        %v1443 = vsel %vm1129, %v1410, 0.0
        %v1444 = vadd.f32 %v1442, %v1443
        %v1445 = vsel %vm1129, %v1413, 0.0
        %v1446 = vadd.f32 %v1444, %v1445
        %v1447 = vrot.slane %v1446, 4
        %v1448 = vadd.f32 %v1446, %v1447
        %v1449 = vrot.slane %v1448, 2
        %v1450 = vadd.f32 %v1448, %v1449
        %v1451 = vrot.slane %v1450, 1
        %v1452 = vadd.f32 %v1450, %v1451
        %v1453 = vmul.f32 %v1386, %v1386
        %v1454 = vmul.f32 %v1389, %v1389
        %v1455 = vmul.f32 %v1394, %v1394
        %v1456 = vmul.f32 %v1397, %v1397
        %v1457 = vmul.f32 %v1402, %v1402
        %v1458 = vmul.f32 %v1405, %v1405
        %v1459 = vmul.f32 %v1410, %v1410
        %v1460 = vmul.f32 %v1413, %v1413
        %v1461 = vsel %vm1129, %v1453, 0.0
        %v1462 = vsel %vm1129, %v1454, 0.0
        %v1463 = vadd.f32 %v1461, %v1462
        %v1464 = vsel %vm1129, %v1455, 0.0
        %v1465 = vadd.f32 %v1463, %v1464
        %v1466 = vsel %vm1129, %v1456, 0.0
        %v1467 = vadd.f32 %v1465, %v1466
        %v1468 = vsel %vm1129, %v1457, 0.0
        %v1469 = vadd.f32 %v1467, %v1468
        %v1470 = vsel %vm1129, %v1458, 0.0
        %v1471 = vadd.f32 %v1469, %v1470
        %v1472 = vsel %vm1129, %v1459, 0.0
        %v1473 = vadd.f32 %v1471, %v1472
        %v1474 = vsel %vm1129, %v1460, 0.0
        %v1475 = vadd.f32 %v1473, %v1474
        %v1476 = vrot.slane %v1475, 4
        %v1477 = vadd.f32 %v1475, %v1476
        %v1478 = vrot.slane %v1477, 2
        %v1479 = vadd.f32 %v1477, %v1478
        %v1480 = vrot.slane %v1479, 1
        %v1481 = vadd.f32 %v1479, %v1480
        %vm1482 = vcmask 1040384
        %v1483 = vsel %vm1482, %v1452, %v1481
        %vm1484 = vcmask 254976
        %1485 = vst.msk [vmem:[%s199] sm:$0x3] %vm1484, %v1483
        %s1486 = sand.u32 %s79, 1
        %s1487 = scalar_lea.sflag [#allocation5], %s1486
        %s1488 = sand.u32 %s79, 1
        %s1489 = smul.addr %s1488, 32
        %s1490 = scalar_lea.vmem [#allocation6], %s1489
        %s1491 = sand.u32 %s105, 1
        %s1492 = scalar_lea.sflag [#allocation8], %s1491
        %s1493 = sand.u32 %s105, 1
        %s1494 = smul.addr %s1493, 2
        %s1495 = scalar_lea.vmem [#allocation7], %s1494
        // Predicated region
        $region33: #{tpu_custom_call.1} parent=27 // pred_check
          %p1496 = pneg %p89
        $region34: #{tpu_custom_call.1} parent=27 // pred_check_branch
          %1498 = sbr.rel (%p1496) target = $region36
        $region35: #{tpu_custom_call.1} parent=27 // pred_region
          %s1500 = ssub.s32 512, 512
          %1501 = vsyncadd %s1487, %s1500
          %s1502 = smul.addr %s24, 8
          %s1503 = smul.addr %s1502, 64
          %s1504 = scalar_lea.hbm %s2, %s1503
          %s1505 = sshll.u32 %s1490, 4
          %s1506 = int_to_ptr.vmem [resolvable:$true] %s1505
          %1511 = dma.vmem_to_hbm [thread:$0]  %s1506, 512, %s1504, %s1487, 64, 64, 4
        $region36: #{tpu_custom_call.1} parent=27 // pred_fallthru
          _
        // Predicated region
        $region37: #{tpu_custom_call.1} parent=27 // pred_check
          %p1512 = pneg %p115
        $region38: #{tpu_custom_call.1} parent=27 // pred_check_branch
          %1514 = sbr.rel (%p1512) target = $region40
        $region39: #{tpu_custom_call.1} parent=27 // pred_region
          %s1516 = ssub.s32 32, 32
          %1517 = vsyncadd %s1492, %s1516
          %s1518 = smul.addr %s24, 32
          %s1519 = scalar_lea.hbm %s3, %s1518
          %s1521 = sshll.u32 %s1495, 4
          %s1522 = int_to_ptr.vmem [resolvable:$true] %s1521
          %1524 = dma.vmem_to_hbm [thread:$0]  %s1522, 32, %s1519, %s1492
        $region40: #{tpu_custom_call.1} parent=27 // pred_fallthru
          _
      $region28: #{tpu_custom_call.1} parent=5 // pred_fallthru
        _
      %p1525 = scmp.le.s32.totalorder 2, %s19
      // Predicated region
      $region41: #{tpu_custom_call.1} parent=5 // pred_check
        %p1526 = pneg %p1525
      $region42: #{tpu_custom_call.1} parent=5 // pred_check_branch
        %1528 = sbr.rel (%p1526) target = $region44
      $region43: #{tpu_custom_call.1} parent=5 // pred_region
        %s1529 = ssub.s32 %s19, 2
        // Predicated region
        $region45: #{tpu_custom_call.1} parent=43 // pred_check
          %p1530 = pneg %p95
        $region46: #{tpu_custom_call.1} parent=43 // pred_check_branch
          %1532 = sbr.rel (%p1530) target = $region48
        $region47: #{tpu_custom_call.1} parent=43 // pred_region
          %s1533 = sand.u32 %s80, 1
          %s1534 = scalar_lea.sflag [#allocation5], %s1533
          %s1535 = sand.u32 %s80, 1
          %s1536 = smul.addr %s1535, 32
          %s1537 = scalar_lea.vmem [#allocation6], %s1536
          %1538 = dma.done %s1534, 512
        $region48: #{tpu_custom_call.1} parent=43 // pred_fallthru
          _
        // Predicated region
        $region49: #{tpu_custom_call.1} parent=43 // pred_check
          %p1539 = pneg %p121
        $region50: #{tpu_custom_call.1} parent=43 // pred_check_branch
          %1541 = sbr.rel (%p1539) target = $region52
        $region51: #{tpu_custom_call.1} parent=43 // pred_region
          %s1542 = sand.u32 %s106, 1
          %s1543 = scalar_lea.sflag [#allocation8], %s1542
          %s1544 = sand.u32 %s106, 1
          %s1545 = smul.addr %s1544, 2
          %s1546 = scalar_lea.vmem [#allocation7], %s1545
          %1547 = dma.done %s1543, 32
        $region52: #{tpu_custom_call.1} parent=43 // pred_fallthru
          _
      $region44: #{tpu_custom_call.1} parent=5 // pred_fallthru
        _
    $region6: #{tpu_custom_call.1} parent=1 // loop_footer
      %s23 = sadd.s32 1, %s19
    $region7: #{tpu_custom_call.1} parent=1 // loop_footer_branch
      %18 = sbr.rel target = $region3
    $region8: #{tpu_custom_call.1} parent=1 // loop_exit
      _
    %1548 = vsyncpa [#allocation4], 1
    %s1549 = scalar_lea.sflag [#allocation4], 1
    %1550 = vsyncpa %s1549, 1
    %1551 = vsyncpa [#allocation5], 1
    %s1552 = scalar_lea.sflag [#allocation5], 1
    %1553 = vsyncpa %s1552, 1
    %1554 = vsyncpa [#allocation8], 1
    %s1555 = scalar_lea.sflag [#allocation8], 1
    %1556 = vsyncpa %s1555, 1

</llo_original>
